<compile_context>
chip_gen: v7x
topology: tpu7x:2x2x1
jax: 0.10.0
libtpu: 0.0.40
codegen_flags: <defaults>
</compile_context>

<pallas_src>
import functools

import jax
import jax.numpy as jnp
from jax.experimental import pallas as pl
from jax.experimental.pallas import tpu as pltpu

# Hyperparameters mirroring the PyTorch script
BLOCK_SIZE = 32
N_EMBD = 32
NUM_HEADS = 4
HEAD_SIZE = 8      # num_heads * head_size == n_embd
LANE = 128         # TPU lane width; embedding dim is padded to this


def mha_kernel(xf_ref, wqk_ref, wvo_ref, bp_ref, o_ref, *,
               batch, seq, num_heads, head_size):
    # xf_ref:  (B*T, Cp)      flattened batch, lane-padded embedding
    # wqk_ref: (2H, hs, Cp)   [scaled-q | k] weights^T per head (lane-dense)
    # wvo_ref: (H, Cp, Cp)    fused value*output-projection weights per head
    # bp_ref:  (1, Cp)        output-projection bias (lane-padded)
    # o_ref:   (B, T, Cp)
    B, T, H, hs = batch, seq, num_heads, head_size
    N = B * T
    Cp = xf_ref.shape[1]

    xf = xf_ref[...]                                              # (N, Cp)

    # ---- head-batched Q/K projection: one einsum, K = Cp = 128 ------------
    xb_qk = jnp.broadcast_to(xf[None], (2 * H, N, Cp))
    qk = jnp.einsum('gnc,gdc->gnd', xb_qk, wqk_ref[...],
                    preferred_element_type=jnp.float32)           # (2H, N, hs)
    # (H, N, hs) -> (H*B, T, hs): tile-aligned split of the sublane dim.
    q = qk[:H].reshape(H * B, T, hs)                              # scaled q
    k = qk[H:].reshape(H * B, T, hs)

    # ---- fused V @ Wproj projection: K = 128, 128-lane-dense output -------
    xb_v = jnp.broadcast_to(xf[None], (H, N, Cp))
    vproj = jnp.einsum('hnc,hcf->hnf', xb_v, wvo_ref[...],
                       preferred_element_type=jnp.float32)        # (H, N, Cp)
    vproj = vproj.reshape(H * B, T, Cp)

    # ---- attention scores: single batched einsum over all (head,batch) ----
    wei = jnp.einsum('gtd,gsd->gts', q, k,
                     preferred_element_type=jnp.float32)          # (H*B, T, T)

    # (T, T) additive causal bias, broadcast over all heads/batches.
    row = jax.lax.broadcasted_iota(jnp.int32, (T, T), 0)
    col = jax.lax.broadcasted_iota(jnp.int32, (T, T), 1)
    bias = jnp.where(col <= row, 0.0, -1e30).astype(jnp.float32)
    wei = wei + bias

    # ---- hand-rolled softmax (divide moved to the EUP) --------------------
    m = jnp.max(wei, axis=-1, keepdims=True)
    p = jnp.exp(wei - m)                       # diagonal always kept -> safe
    denom = jnp.sum(p, axis=-1, keepdims=True)
    inv = pl.reciprocal(denom, approx=True)
    inv = inv * (2.0 - denom * inv)            # one Newton step: ~f32 accuracy
    probs = p * inv
    # dropout(probs) -> identity (eval mode)

    # ---- attention-weighted, already-projected values ----------------------
    out_g = jnp.einsum('gts,gsf->gtf', probs, vproj,
                       preferred_element_type=jnp.float32)        # (H*B, T, Cp)

    # Head-sum: 3 vector adds over (B, T, Cp) tiles (outer-dim slices only).
    o4 = out_g.reshape(H, B, T, Cp)
    out = o4[0]
    for h in range(1, H):
        out = out + o4[h]
    out = out + bp_ref[...]                                        # (1, Cp) bcast
    # dropout(out) -> identity (eval mode)

    o_ref[...] = out.astype(o_ref.dtype)


def multi_head_attention(x, wq, wk, wv, wp, bp, *, num_heads, head_size):
    """x: (B, T, C); wq/wk/wv: (H, C, hs) (torch Linear weight.T per head);
    wp: (H*hs, C); bp: (C,)."""
    B, T, C = x.shape
    H, _, hs = wq.shape
    scale = 1.0 / (head_size ** 0.5)
    Cp = LANE
    assert C <= Cp

    # --- one-time weight fusion / lane padding (plain XLA ops, outside kernel)
    # Q/K weights transposed to (head, hs, C) so the kernel weight operand is
    # lane-dense; the 1/sqrt(hs) scale is folded into the query weights.
    wq_t = jnp.transpose(wq, (0, 2, 1)) * scale          # (H, hs, C)
    wk_t = jnp.transpose(wk, (0, 2, 1))                  # (H, hs, C)
    wqk = jnp.concatenate([wq_t, wk_t], axis=0)          # (2H, hs, C)
    wqk = jnp.pad(wqk, ((0, 0), (0, 0), (0, Cp - C)))    # (2H, hs, Cp)

    # Fused value + output-projection weight per head: wv[h] @ wp[h]  (exact
    # reassociation of (P@ (x@Wv)) @ Wp  ->  P @ (x @ (Wv@Wp))).
    wp3 = wp.reshape(H, hs, C)
    wvo = jnp.einsum('hcd,hdf->hcf', wv, wp3)            # (H, C, C)
    wvo = jnp.pad(wvo, ((0, 0), (0, Cp - C), (0, Cp - C)))   # (H, Cp, Cp)

    xf = jnp.pad(x.reshape(B * T, C), ((0, 0), (0, Cp - C)))  # (B*T, Cp)
    bp_p = jnp.pad(bp, (0, Cp - C)).reshape(1, Cp)

    kernel = functools.partial(mha_kernel, batch=B, seq=T,
                               num_heads=H, head_size=hs)

    out_p = pl.pallas_call(
        kernel,
        out_shape=jax.ShapeDtypeStruct((B, T, Cp), x.dtype),
        grid_spec=pltpu.PrefetchScalarGridSpec(
            num_scalar_prefetch=0,
            grid=(1,),  # whole problem in one step: working set << VMEM
            in_specs=[
                pl.BlockSpec((B * T, Cp), lambda i: (0, 0)),          # xf
                pl.BlockSpec((2 * H, hs, Cp), lambda i: (0, 0, 0)),   # wqk
                pl.BlockSpec((H, Cp, Cp), lambda i: (0, 0, 0)),       # wvo
                pl.BlockSpec((1, Cp), lambda i: (0, 0)),              # bias
            ],
            out_specs=pl.BlockSpec((B, T, Cp), lambda i: (0, 0, 0)),
        ),
        compiler_params=pltpu.CompilerParams(
            dimension_semantics=("arbitrary",)),
    )(xf, wqk, wvo, bp_p)

    return out_p[:, :, :C]


def reference_mha(x, wq, wk, wv, wp, bp, *, head_size):
    """Pure-JAX reference mirroring the PyTorch forward (eval mode)."""
    B, T, C = x.shape
    outs = []
    mask = jnp.tril(jnp.ones((T, T)))
    for h in range(wq.shape[0]):
        q = x @ wq[h]
        k = x @ wk[h]
        v = x @ wv[h]
        wei = (q @ jnp.swapaxes(k, -2, -1)) / (head_size ** 0.5)
        wei = jnp.where(mask[None] == 0, -jnp.inf, wei)
        wei = jax.nn.softmax(wei, axis=-1)
        outs.append(wei @ v)
    cat = jnp.concatenate(outs, axis=-1)
    return cat @ wp + bp


if __name__ == "__main__":
    B, T, C = 2, 8, N_EMBD
    H, hs = NUM_HEADS, HEAD_SIZE

    key = jax.random.PRNGKey(0)
    kx, kq, kk, kv, kp, kb = jax.random.split(key, 6)

    x = jax.random.normal(kx, (B, T, C), dtype=jnp.float32)
    # Per-head projection weights in (in, out) layout (== torch Linear weight.T)
    wq = jax.random.normal(kq, (H, C, hs), dtype=jnp.float32) * 0.1
    wk = jax.random.normal(kk, (H, C, hs), dtype=jnp.float32) * 0.1
    wv = jax.random.normal(kv, (H, C, hs), dtype=jnp.float32) * 0.1
    wp = jax.random.normal(kp, (H * hs, C), dtype=jnp.float32) * 0.1
    bp = jax.random.normal(kb, (C,), dtype=jnp.float32) * 0.1

    out = multi_head_attention(x, wq, wk, wv, wp, bp,
                               num_heads=H, head_size=hs)
    out = jax.block_until_ready(out)

    ref = reference_mha(x, wq, wk, wv, wp, bp, head_size=hs)
    assert out.shape == (B, T, C)
    # Tolerance allows for the (exact-in-real-arithmetic) Wv@Wp pre-fusion and
    # the EUP reciprocal + Newton step (both << 1e-4 in practice).
    assert jnp.allclose(out, ref, atol=5e-4, rtol=5e-4)

    print("KERNEL_OK")
</pallas_src>

<mosaic_0001>
module attributes {stable_mosaic.version = 11 : i64} {
  func.func @mha_kernel(%arg0: i32, %arg1: memref<16x128xf32, #tpu.memory_space<vmem>>, %arg2: memref<8x8x128xf32, #tpu.memory_space<vmem>>, %arg3: memref<4x128x128xf32, #tpu.memory_space<vmem>>, %arg4: memref<1x128xf32, #tpu.memory_space<vmem>>, %arg5: memref<2x8x128xf32, #tpu.memory_space<vmem>>) attributes {dimension_semantics = [#tpu.dimension_semantics<arbitrary>], iteration_bounds = array<i64: 1>, scalar_prefetch = 0 : i64, scratch_operands = 0 : i64, tpu.core_type = #tpu.core_type<tc>, window_params = [{pipeline_mode = #tpu.pipeline_mode<synchronous>, transform_indices = @transform_0, window_bounds = array<i64: 16, 128>}, {pipeline_mode = #tpu.pipeline_mode<synchronous>, transform_indices = @transform_1, window_bounds = array<i64: 8, 8, 128>}, {pipeline_mode = #tpu.pipeline_mode<synchronous>, transform_indices = @transform_2, window_bounds = array<i64: 4, 128, 128>}, {pipeline_mode = #tpu.pipeline_mode<synchronous>, transform_indices = @transform_3, window_bounds = array<i64: 1, 128>}, {pipeline_mode = #tpu.pipeline_mode<synchronous>, transform_indices = @transform_4, window_bounds = array<i64: 2, 8, 128>}]} {
    %c0 = arith.constant 0 : index
    %c0_0 = arith.constant 0 : index
    %0 = vector.load %arg1[%c0, %c0_0] : memref<16x128xf32, #tpu.memory_space<vmem>>, vector<16x128xf32>
    %1 = vector.shape_cast %0 : vector<16x128xf32> to vector<1x16x128xf32>
    %2 = vector.shape_cast %1 : vector<1x16x128xf32> to vector<1x16x128xf32>
    %3 = vector.broadcast %2 : vector<1x16x128xf32> to vector<8x16x128xf32>
    %c0_1 = arith.constant 0 : index
    %c0_2 = arith.constant 0 : index
    %c0_3 = arith.constant 0 : index
    %4 = vector.load %arg2[%c0_1, %c0_2, %c0_3] : memref<8x8x128xf32, #tpu.memory_space<vmem>>, vector<8x8x128xf32>
    "tpu.trace_start"() <{level = 10 : i32, message = "gnc,gdc->gnd"}> : () -> ()
    %cst = arith.constant dense<0.000000e+00> : vector<8x16x8xf32>
    %5 = tpu.matmul %3, %4, %cst {dimension_numbers = #tpu.dot_dimension_numbers<[2], [2], [1], [1], [0, 0, 0, 1, 1, 1], [0], [0]>} : vector<8x16x128xf32>, vector<8x8x128xf32>, vector<8x16x8xf32> -> vector<8x16x8xf32>
    "tpu.trace_stop"() : () -> ()
    %6 = vector.extract_strided_slice %5 {offsets = [0, 0, 0], sizes = [4, 16, 8], strides = [1, 1, 1]} : vector<8x16x8xf32> to vector<4x16x8xf32>
    %7 = vector.shape_cast %6 : vector<4x16x8xf32> to vector<8x8x8xf32>
    %8 = vector.extract_strided_slice %5 {offsets = [4, 0, 0], sizes = [4, 16, 8], strides = [1, 1, 1]} : vector<8x16x8xf32> to vector<4x16x8xf32>
    %9 = vector.shape_cast %8 : vector<4x16x8xf32> to vector<8x8x8xf32>
    %10 = vector.shape_cast %0 : vector<16x128xf32> to vector<1x16x128xf32>
    %11 = vector.shape_cast %10 : vector<1x16x128xf32> to vector<1x16x128xf32>
    %12 = vector.broadcast %11 : vector<1x16x128xf32> to vector<4x16x128xf32>
    %c0_4 = arith.constant 0 : index
    %c0_5 = arith.constant 0 : index
    %c0_6 = arith.constant 0 : index
    %13 = vector.load %arg3[%c0_4, %c0_5, %c0_6] : memref<4x128x128xf32, #tpu.memory_space<vmem>>, vector<4x128x128xf32>
    "tpu.trace_start"() <{level = 10 : i32, message = "hnc,hcf->hnf"}> : () -> ()
    %cst_7 = arith.constant dense<0.000000e+00> : vector<4x16x128xf32>
    %14 = tpu.matmul %12, %13, %cst_7 {dimension_numbers = #tpu.dot_dimension_numbers<[2], [1], [1], [2], [0, 0, 0, 1, 1, 2], [0], [0]>} : vector<4x16x128xf32>, vector<4x128x128xf32>, vector<4x16x128xf32> -> vector<4x16x128xf32>
    "tpu.trace_stop"() : () -> ()
    %15 = vector.shape_cast %14 : vector<4x16x128xf32> to vector<8x8x128xf32>
    "tpu.trace_start"() <{level = 10 : i32, message = "gtd,gsd->gts"}> : () -> ()
    %cst_8 = arith.constant dense<0.000000e+00> : vector<8x8x8xf32>
    %16 = tpu.matmul %7, %9, %cst_8 {dimension_numbers = #tpu.dot_dimension_numbers<[2], [2], [1], [1], [0, 0, 0, 1, 1, 1], [0], [0]>} : vector<8x8x8xf32>, vector<8x8x8xf32>, vector<8x8x8xf32> -> vector<8x8x8xf32>
    "tpu.trace_stop"() : () -> ()
    %17 = tpu.iota {dimensions = array<i32: 0>} : vector<8x8xi32>
    %18 = tpu.iota {dimensions = array<i32: 1>} : vector<8x8xi32>
    %19 = arith.cmpi sle, %18, %17 : vector<8x8xi32>
    %cst_9 = arith.constant 0.000000e+00 : f32
    %cst_10 = arith.constant -1.000000e+30 : f32
    %20 = vector.broadcast %cst_9 : f32 to vector<8x8xf32>
    %21 = vector.broadcast %cst_10 : f32 to vector<8x8xf32>
    %22 = arith.select %19, %20, %21 : vector<8x8xi1>, vector<8x8xf32>
    %23 = vector.shape_cast %22 : vector<8x8xf32> to vector<1x8x8xf32>
    %24 = vector.broadcast %23 : vector<1x8x8xf32> to vector<8x8x8xf32>
    %25 = arith.addf %16, %24 : vector<8x8x8xf32>
    %cst_11 = arith.constant dense<0xFF800000> : vector<8x8xf32>
    %26 = vector.multi_reduction <maximumf>, %25, %cst_11 [2] : vector<8x8x8xf32> to vector<8x8xf32>
    %27 = vector.shape_cast %26 : vector<8x8xf32> to vector<8x8x1xf32>
    %28 = vector.broadcast %27 : vector<8x8x1xf32> to vector<8x8x8xf32>
    %29 = arith.subf %25, %28 : vector<8x8x8xf32>
    %30 = math.exp %29 : vector<8x8x8xf32>
    %cst_12 = arith.constant dense<0.000000e+00> : vector<8x8xf32>
    %31 = vector.multi_reduction <add>, %30, %cst_12 [2] : vector<8x8x8xf32> to vector<8x8xf32>
    %32 = vector.shape_cast %31 : vector<8x8xf32> to vector<8x8x1xf32>
    %33 = tpu.reciprocal %32 {approx = true} : vector<8x8x1xf32> -> vector<8x8x1xf32>
    %34 = arith.mulf %32, %33 : vector<8x8x1xf32>
    %cst_13 = arith.constant 2.000000e+00 : f32
    %35 = vector.broadcast %cst_13 : f32 to vector<8x8x1xf32>
    %36 = arith.subf %35, %34 : vector<8x8x1xf32>
    %37 = arith.mulf %33, %36 : vector<8x8x1xf32>
    %38 = vector.broadcast %37 : vector<8x8x1xf32> to vector<8x8x8xf32>
    %39 = arith.mulf %30, %38 : vector<8x8x8xf32>
    "tpu.trace_start"() <{level = 10 : i32, message = "gts,gsf->gtf"}> : () -> ()
    %cst_14 = arith.constant dense<0.000000e+00> : vector<8x8x128xf32>
    %40 = tpu.matmul %39, %15, %cst_14 {dimension_numbers = #tpu.dot_dimension_numbers<[2], [1], [1], [2], [0, 0, 0, 1, 1, 2], [0], [0]>} : vector<8x8x8xf32>, vector<8x8x128xf32>, vector<8x8x128xf32> -> vector<8x8x128xf32>
    "tpu.trace_stop"() : () -> ()
    %41 = vector.shape_cast %40 : vector<8x8x128xf32> to vector<4x2x8x128xf32>
    %42 = vector.extract_strided_slice %41 {offsets = [0, 0, 0, 0], sizes = [1, 2, 8, 128], strides = [1, 1, 1, 1]} : vector<4x2x8x128xf32> to vector<1x2x8x128xf32>
    %43 = vector.shape_cast %42 : vector<1x2x8x128xf32> to vector<2x8x128xf32>
    %44 = vector.extract_strided_slice %41 {offsets = [1, 0, 0, 0], sizes = [1, 2, 8, 128], strides = [1, 1, 1, 1]} : vector<4x2x8x128xf32> to vector<1x2x8x128xf32>
    %45 = vector.shape_cast %44 : vector<1x2x8x128xf32> to vector<2x8x128xf32>
    %46 = arith.addf %43, %45 : vector<2x8x128xf32>
    %47 = vector.extract_strided_slice %41 {offsets = [2, 0, 0, 0], sizes = [1, 2, 8, 128], strides = [1, 1, 1, 1]} : vector<4x2x8x128xf32> to vector<1x2x8x128xf32>
    %48 = vector.shape_cast %47 : vector<1x2x8x128xf32> to vector<2x8x128xf32>
    %49 = arith.addf %46, %48 : vector<2x8x128xf32>
    %50 = vector.extract_strided_slice %41 {offsets = [3, 0, 0, 0], sizes = [1, 2, 8, 128], strides = [1, 1, 1, 1]} : vector<4x2x8x128xf32> to vector<1x2x8x128xf32>
    %51 = vector.shape_cast %50 : vector<1x2x8x128xf32> to vector<2x8x128xf32>
    %52 = arith.addf %49, %51 : vector<2x8x128xf32>
    %c0_15 = arith.constant 0 : index
    %c0_16 = arith.constant 0 : index
    %53 = vector.load %arg4[%c0_15, %c0_16] : memref<1x128xf32, #tpu.memory_space<vmem>>, vector<1x128xf32>
    %54 = vector.shape_cast %53 : vector<1x128xf32> to vector<1x1x128xf32>
    %55 = vector.broadcast %54 : vector<1x1x128xf32> to vector<2x8x128xf32>
    %56 = arith.addf %52, %55 : vector<2x8x128xf32>
    %c0_17 = arith.constant 0 : index
    %c0_18 = arith.constant 0 : index
    %c0_19 = arith.constant 0 : index
    %57 = vector.load %arg5[%c0_17, %c0_18, %c0_19] : memref<2x8x128xf32, #tpu.memory_space<vmem>>, vector<2x8x128xf32>
    tpu.vector_store %arg5[%c0_17, %c0_18, %c0_19], %56 {strides = array<i32>} : memref<2x8x128xf32, #tpu.memory_space<vmem>>, vector<2x8x128xf32>,
    return
  }
  func.func @transform_0(%arg0: i32) -> (i32, i32) {
    %c0_i32 = arith.constant 0 : i32
    %c0_i32_0 = arith.constant 0 : i32
    %c0_i32_1 = arith.constant 0 : i32
    return %c0_i32, %c0_i32_0 : i32, i32
  }
  func.func @transform_1(%arg0: i32) -> (i32, i32, i32) {
    %c0_i32 = arith.constant 0 : i32
    %c0_i32_0 = arith.constant 0 : i32
    %c0_i32_1 = arith.constant 0 : i32
    %c0_i32_2 = arith.constant 0 : i32
    return %c0_i32, %c0_i32_0, %c0_i32_1 : i32, i32, i32
  }
  func.func @transform_2(%arg0: i32) -> (i32, i32, i32) {
    %c0_i32 = arith.constant 0 : i32
    %c0_i32_0 = arith.constant 0 : i32
    %c0_i32_1 = arith.constant 0 : i32
    %c0_i32_2 = arith.constant 0 : i32
    return %c0_i32, %c0_i32_0, %c0_i32_1 : i32, i32, i32
  }
  func.func @transform_3(%arg0: i32) -> (i32, i32) {
    %c0_i32 = arith.constant 0 : i32
    %c0_i32_0 = arith.constant 0 : i32
    %c0_i32_1 = arith.constant 0 : i32
    return %c0_i32, %c0_i32_0 : i32, i32
  }
  func.func @transform_4(%arg0: i32) -> (i32, i32, i32) {
    %c0_i32 = arith.constant 0 : i32
    %c0_i32_0 = arith.constant 0 : i32
    %c0_i32_1 = arith.constant 0 : i32
    %c0_i32_2 = arith.constant 0 : i32
    return %c0_i32, %c0_i32_0, %c0_i32_1 : i32, i32, i32
  }
}

</mosaic_0001>

<llo_original>
// kernel: tpu_custom_call.1
$region0: #{tpu_custom_call.1}
  #allocation0 [shape = 'u32[]', space=smem, size = 0x4, offset = 0x4, fixed_abs, tag = 'smem constant byte address 0x4 - core index']
  #allocation1 [shape = 'u32[144,128]{1,0:T(1,128)}', space=vmem, size = 0x12000, scoped, tag = 'internal scratch']
  %s0 = inlined_call_operand.hbm [shape: f32[16,128], index: 0, kind: input, shape index: {}]
  %s1 = inlined_call_operand.hbm [shape: f32[8,8,128], index: 1, kind: input, shape index: {}]
  %s2 = inlined_call_operand.hbm [shape: f32[4,128,128], index: 2, kind: input, shape index: {}]
  %s3 = inlined_call_operand.vmem [shape: f32[1,128], index: 3, kind: input, shape index: {}]
  %s4 = inlined_call_operand.hbm [shape: f32[2,8,128], index: 4, kind: output, shape index: {}]
  %s5 = sld [smem:[#allocation0]]
  $region38: #{tpu_custom_call.1} parent=0
    _
  %s7 = ssub.s32 1, %s5
  %s8 = scalar_select 0, %s7, %s5
  $region1: #{tpu_custom_call.1} parent=0
    #allocation2 [shape = 'u8[8192]{0}', space=vmem, size = 0x2000, scoped, tag = 'input window, operand 0, single buffered']
    #allocation3 [shape = 's32[1]{0}', space=sflag, size = 0x4, scoped, tag = 'scoped memory for tpu_custom_call.1']
    #allocation4 [shape = 's32[1]{0}', space=sflag, size = 0x4, scoped, tag = 'scoped memory for tpu_custom_call.1']
    #allocation5 [shape = 'u8[32768]{0}', space=vmem, size = 0x8000, scoped, tag = 'input window, operand 1, single buffered']
    #allocation6 [shape = 's32[1]{0}', space=sflag, size = 0x4, scoped, tag = 'scoped memory for tpu_custom_call.1']
    #allocation7 [shape = 'u8[262144]{0}', space=vmem, size = 0x40000, scoped, tag = 'input window, operand 2, single buffered']
    #allocation8 [shape = 'u8[8192]{0}', space=vmem, size = 0x2000, scoped, tag = 'output window, operand 0, single buffered']
    %9 = vsyncpa [#allocation3], 0
    %10 = vsyncpa [#allocation6], 0
    %11 = vsyncpa [#allocation4], 0
    // Predicated region
    $region2: #{tpu_custom_call.1} parent=1 // pred_check
      _
    $region3: #{tpu_custom_call.1} parent=1 // pred_check_branch
      %13 = sbr.rel (0) target = $region5
    $region4: #{tpu_custom_call.1} parent=1 // pred_region
      %s15 = ssub.s32 256, 256
      %16 = vsyncadd [#allocation3], %s15
      %s17 = sshll.u32 [#allocation2], 4
      %s18 = int_to_ptr.vmem [resolvable:$true] %s17
      %23 = dma.hbm_to_vmem [thread:$0]  %s0, 256, %s18, [#allocation3], 128, 128, 8
    $region5: #{tpu_custom_call.1} parent=1 // pred_fallthru
      _
    // Predicated region
    $region6: #{tpu_custom_call.1} parent=1 // pred_check
      _
    $region7: #{tpu_custom_call.1} parent=1 // pred_check_branch
      %25 = sbr.rel (0) target = $region9
    $region8: #{tpu_custom_call.1} parent=1 // pred_region
      %s27 = ssub.s32 1024, 1024
      %28 = vsyncadd [#allocation6], %s27
      %s29 = sshll.u32 [#allocation5], 4
      %s30 = int_to_ptr.vmem [resolvable:$true] %s29
      %35 = dma.hbm_to_vmem [thread:$0]  %s1, 1024, %s30, [#allocation6], 128, 128, 8
    $region9: #{tpu_custom_call.1} parent=1 // pred_fallthru
      _
    // Predicated region
    $region10: #{tpu_custom_call.1} parent=1 // pred_check
      _
    $region11: #{tpu_custom_call.1} parent=1 // pred_check_branch
      %37 = sbr.rel (0) target = $region13
    $region12: #{tpu_custom_call.1} parent=1 // pred_region
      %s39 = ssub.s32 8192, 8192
      %40 = vsyncadd [#allocation6], %s39
      %s41 = sshll.u32 [#allocation7], 4
      %s42 = int_to_ptr.vmem [resolvable:$true] %s41
      %47 = dma.hbm_to_vmem [thread:$0]  %s2, 8192, %s42, [#allocation6], 128, 128, 8
    $region13: #{tpu_custom_call.1} parent=1 // pred_fallthru
      _
    // Predicated region
    $region14: #{tpu_custom_call.1} parent=1 // pred_check
      _
    $region15: #{tpu_custom_call.1} parent=1 // pred_check_branch
      %49 = sbr.rel (0) target = $region17
    $region16: #{tpu_custom_call.1} parent=1 // pred_region
      _
    $region17: #{tpu_custom_call.1} parent=1 // pred_fallthru
      _
    // Predicated region
    $region18: #{tpu_custom_call.1} parent=1 // pred_check
      _
    $region19: #{tpu_custom_call.1} parent=1 // pred_check_branch
      %51 = sbr.rel (0) target = $region21
    $region20: #{tpu_custom_call.1} parent=1 // pred_region
      %52 = dma.done [#allocation3], 256
    $region21: #{tpu_custom_call.1} parent=1 // pred_fallthru
      _
    // Predicated region
    $region22: #{tpu_custom_call.1} parent=1 // pred_check
      _
    $region23: #{tpu_custom_call.1} parent=1 // pred_check_branch
      %54 = sbr.rel (0) target = $region25
    $region24: #{tpu_custom_call.1} parent=1 // pred_region
      %55 = dma.done [#allocation6], 1024
    $region25: #{tpu_custom_call.1} parent=1 // pred_fallthru
      _
    // Predicated region
    $region26: #{tpu_custom_call.1} parent=1 // pred_check
      _
    $region27: #{tpu_custom_call.1} parent=1 // pred_check_branch
      %57 = sbr.rel (0) target = $region29
    $region28: #{tpu_custom_call.1} parent=1 // pred_region
      %58 = dma.done [#allocation6], 8192
    $region29: #{tpu_custom_call.1} parent=1 // pred_fallthru
      _
    %v59 = vld [vmem:[#allocation2] sm:$0xff]
    %v60 = vld [vmem:[#allocation2 + $0x8] sm:$0xff]
    %v61 = vld [vmem:[#allocation5] sm:$0xff]
    %v62 = vld [vmem:[#allocation5 + $0x8] sm:$0xff]
    %v63 = vld [vmem:[#allocation5 + $0x10] sm:$0xff]
    %v64 = vld [vmem:[#allocation5 + $0x18] sm:$0xff]
    %v65 = vld [vmem:[#allocation5 + $0x20] sm:$0xff]
    %v66 = vld [vmem:[#allocation5 + $0x28] sm:$0xff]
    %v67 = vld [vmem:[#allocation5 + $0x30] sm:$0xff]
    %v68 = vld [vmem:[#allocation5 + $0x38] sm:$0xff]
    %69 = vmatprep.subr.mxu0 0.0
    %70 = vmatpush1.xpose.msra.mxu0 %v61
    %71 = vmatprep.subr.mxu0 0.0
    %72 = vmatpush1.xpose.msra.mxu0 0.0
    %73 = vmatprep.subr.mxu0 0.0
    %74 = vmatpush1.xpose.msra.mxu0 0.0
    %75 = vmatprep.subr.mxu0 0.0
    %76 = vmatpush1.xpose.msra.mxu0 0.0
    %77 = vmatprep.subr.mxu0 0.0
    %78 = vmatpush1.xpose.msra.mxu0 0.0
    %79 = vmatprep.subr.mxu0 0.0
    %80 = vmatpush1.xpose.msra.mxu0 0.0
    %81 = vmatprep.subr.mxu0 0.0
    %82 = vmatpush1.xpose.msra.mxu0 0.0
    %83 = vmatprep.subr.mxu0 0.0
    %84 = vmatpush1.xpose.msra.mxu0 0.0
    %85 = vmatprep.subr.mxu0 0.0
    %86 = vmatpush1.xpose.msra.mxu0 0.0
    %87 = vmatprep.subr.mxu0 0.0
    %88 = vmatpush1.xpose.msra.mxu0 0.0
    %89 = vmatprep.subr.mxu0 0.0
    %90 = vmatpush1.xpose.msra.mxu0 0.0
    %91 = vmatprep.subr.mxu0 0.0
    %92 = vmatpush1.xpose.msra.mxu0 0.0
    %93 = vmatprep.subr.mxu0 0.0
    %94 = vmatpush1.xpose.msra.mxu0 0.0
    %95 = vmatprep.subr.mxu0 0.0
    %96 = vmatpush1.xpose.msra.mxu0 0.0
    %97 = vmatprep.subr.mxu0 0.0
    %98 = vmatpush1.xpose.msra.mxu0 0.0
    %99 = vmatprep.subr.mxu0 0.0
    %100 = vmatpush1.xpose.msra.mxu0 0.0
    %101 = vmatprep.subr.mxu0 0.0
    %102 = vmatpush1.xpose.msra.mxu0 0.0
    %103 = vmatprep.subr.mxu0 0.0
    %104 = vmatpush1.xpose.msra.mxu0 0.0
    %105 = vmatprep.subr.mxu0 0.0
    %106 = vmatpush1.xpose.msra.mxu0 0.0
    %107 = vmatprep.subr.mxu0 0.0
    %108 = vmatpush1.xpose.msra.mxu0 0.0
    %109 = vmatprep.subr.mxu0 0.0
    %110 = vmatpush1.xpose.msra.mxu0 0.0
    %111 = vmatprep.subr.mxu0 0.0
    %112 = vmatpush1.xpose.msra.mxu0 0.0
    %113 = vmatprep.subr.mxu0 0.0
    %114 = vmatpush1.xpose.msra.mxu0 0.0
    %115 = vmatprep.subr.mxu0 0.0
    %116 = vmatpush1.xpose.msra.mxu0 0.0
    %117 = vmatprep.subr.mxu0 0.0
    %118 = vmatpush1.xpose.msra.mxu0 0.0
    %119 = vmatprep.subr.mxu0 0.0
    %120 = vmatpush1.xpose.msra.mxu0 0.0
    %121 = vmatprep.subr.mxu0 0.0
    %122 = vmatpush1.xpose.msra.mxu0 0.0
    %123 = vmatprep.subr.mxu0 0.0
    %124 = vmatpush1.xpose.msra.mxu0 0.0
    %125 = vmatprep.subr.mxu0 0.0
    %126 = vmatpush1.xpose.msra.mxu0 0.0
    %127 = vmatprep.subr.mxu0 0.0
    %128 = vmatpush1.xpose.msra.mxu0 0.0
    %129 = vmatprep.subr.mxu0 0.0
    %130 = vmatpush1.xpose.msra.mxu0 0.0
    %131 = vmatprep.subr.mxu0 0.0
    %132 = vmatpush1.xpose.msra.mxu0 0.0
    %133 = vmatprep.mubr.f32.mxu0 0.0
    %134 = vmatmul.mubr.f32.gmra.mrb[0].mxu0 %v59
    %v135 = vpop.f32.mrb[0].mxu0
    %v136 = vadd.f32 0.0, %v135
    %v137 = vpop.f32.mrb[0].mxu0
    %138 = vmatprep.mubr.f32.mxu0 0.0
    %139 = vmatmul.mubr.f32.gmra.mrb[0].mxu0 %v60
    %v140 = vpop.f32.mrb[0].mxu0
    %v141 = vadd.f32 0.0, %v140
    %v142 = vpop.f32.mrb[0].mxu0
    %143 = vdwg.mxu0
    %144 = vmatprep.subr.mxu0 0.0
    %145 = vmatpush1.xpose.msra.mxu0 %v62
    %146 = vmatprep.subr.mxu0 0.0
    %147 = vmatpush1.xpose.msra.mxu0 0.0
    %148 = vmatprep.subr.mxu0 0.0
    %149 = vmatpush1.xpose.msra.mxu0 0.0
    %150 = vmatprep.subr.mxu0 0.0
    %151 = vmatpush1.xpose.msra.mxu0 0.0
    %152 = vmatprep.subr.mxu0 0.0
    %153 = vmatpush1.xpose.msra.mxu0 0.0
    %154 = vmatprep.subr.mxu0 0.0
    %155 = vmatpush1.xpose.msra.mxu0 0.0
    %156 = vmatprep.subr.mxu0 0.0
    %157 = vmatpush1.xpose.msra.mxu0 0.0
    %158 = vmatprep.subr.mxu0 0.0
    %159 = vmatpush1.xpose.msra.mxu0 0.0
    %160 = vmatprep.subr.mxu0 0.0
    %161 = vmatpush1.xpose.msra.mxu0 0.0
    %162 = vmatprep.subr.mxu0 0.0
    %163 = vmatpush1.xpose.msra.mxu0 0.0
    %164 = vmatprep.subr.mxu0 0.0
    %165 = vmatpush1.xpose.msra.mxu0 0.0
    %166 = vmatprep.subr.mxu0 0.0
    %167 = vmatpush1.xpose.msra.mxu0 0.0
    %168 = vmatprep.subr.mxu0 0.0
    %169 = vmatpush1.xpose.msra.mxu0 0.0
    %170 = vmatprep.subr.mxu0 0.0
    %171 = vmatpush1.xpose.msra.mxu0 0.0
    %172 = vmatprep.subr.mxu0 0.0
    %173 = vmatpush1.xpose.msra.mxu0 0.0
    %174 = vmatprep.subr.mxu0 0.0
    %175 = vmatpush1.xpose.msra.mxu0 0.0
    %176 = vmatprep.subr.mxu0 0.0
    %177 = vmatpush1.xpose.msra.mxu0 0.0
    %178 = vmatprep.subr.mxu0 0.0
    %179 = vmatpush1.xpose.msra.mxu0 0.0
    %180 = vmatprep.subr.mxu0 0.0
    %181 = vmatpush1.xpose.msra.mxu0 0.0
    %182 = vmatprep.subr.mxu0 0.0
    %183 = vmatpush1.xpose.msra.mxu0 0.0
    %184 = vmatprep.subr.mxu0 0.0
    %185 = vmatpush1.xpose.msra.mxu0 0.0
    %186 = vmatprep.subr.mxu0 0.0
    %187 = vmatpush1.xpose.msra.mxu0 0.0
    %188 = vmatprep.subr.mxu0 0.0
    %189 = vmatpush1.xpose.msra.mxu0 0.0
    %190 = vmatprep.subr.mxu0 0.0
    %191 = vmatpush1.xpose.msra.mxu0 0.0
    %192 = vmatprep.subr.mxu0 0.0
    %193 = vmatpush1.xpose.msra.mxu0 0.0
    %194 = vmatprep.subr.mxu0 0.0
    %195 = vmatpush1.xpose.msra.mxu0 0.0
    %196 = vmatprep.subr.mxu0 0.0
    %197 = vmatpush1.xpose.msra.mxu0 0.0
    %198 = vmatprep.subr.mxu0 0.0
    %199 = vmatpush1.xpose.msra.mxu0 0.0
    %200 = vmatprep.subr.mxu0 0.0
    %201 = vmatpush1.xpose.msra.mxu0 0.0
    %202 = vmatprep.subr.mxu0 0.0
    %203 = vmatpush1.xpose.msra.mxu0 0.0
    %204 = vmatprep.subr.mxu0 0.0
    %205 = vmatpush1.xpose.msra.mxu0 0.0
    %206 = vmatprep.subr.mxu0 0.0
    %207 = vmatpush1.xpose.msra.mxu0 0.0
    %208 = vmatprep.mubr.f32.mxu0 0.0
    %209 = vmatmul.mubr.f32.gmra.mrb[0].mxu0 %v59
    %v210 = vpop.f32.mrb[0].mxu0
    %v211 = vadd.f32 0.0, %v210
    %v212 = vpop.f32.mrb[0].mxu0
    %213 = vmatprep.mubr.f32.mxu0 0.0
    %214 = vmatmul.mubr.f32.gmra.mrb[0].mxu0 %v60
    %v215 = vpop.f32.mrb[0].mxu0
    %v216 = vadd.f32 0.0, %v215
    %v217 = vpop.f32.mrb[0].mxu0
    %218 = vdwg.mxu0
    %219 = vmatprep.subr.mxu0 0.0
    %220 = vmatpush1.xpose.msra.mxu0 %v63
    %221 = vmatprep.subr.mxu0 0.0
    %222 = vmatpush1.xpose.msra.mxu0 0.0
    %223 = vmatprep.subr.mxu0 0.0
    %224 = vmatpush1.xpose.msra.mxu0 0.0
    %225 = vmatprep.subr.mxu0 0.0
    %226 = vmatpush1.xpose.msra.mxu0 0.0
    %227 = vmatprep.subr.mxu0 0.0
    %228 = vmatpush1.xpose.msra.mxu0 0.0
    %229 = vmatprep.subr.mxu0 0.0
    %230 = vmatpush1.xpose.msra.mxu0 0.0
    %231 = vmatprep.subr.mxu0 0.0
    %232 = vmatpush1.xpose.msra.mxu0 0.0
    %233 = vmatprep.subr.mxu0 0.0
    %234 = vmatpush1.xpose.msra.mxu0 0.0
    %235 = vmatprep.subr.mxu0 0.0
    %236 = vmatpush1.xpose.msra.mxu0 0.0
    %237 = vmatprep.subr.mxu0 0.0
    %238 = vmatpush1.xpose.msra.mxu0 0.0
    %239 = vmatprep.subr.mxu0 0.0
    %240 = vmatpush1.xpose.msra.mxu0 0.0
    %241 = vmatprep.subr.mxu0 0.0
    %242 = vmatpush1.xpose.msra.mxu0 0.0
    %243 = vmatprep.subr.mxu0 0.0
    %244 = vmatpush1.xpose.msra.mxu0 0.0
    %245 = vmatprep.subr.mxu0 0.0
    %246 = vmatpush1.xpose.msra.mxu0 0.0
    %247 = vmatprep.subr.mxu0 0.0
    %248 = vmatpush1.xpose.msra.mxu0 0.0
    %249 = vmatprep.subr.mxu0 0.0
    %250 = vmatpush1.xpose.msra.mxu0 0.0
    %251 = vmatprep.subr.mxu0 0.0
    %252 = vmatpush1.xpose.msra.mxu0 0.0
    %253 = vmatprep.subr.mxu0 0.0
    %254 = vmatpush1.xpose.msra.mxu0 0.0
    %255 = vmatprep.subr.mxu0 0.0
    %256 = vmatpush1.xpose.msra.mxu0 0.0
    %257 = vmatprep.subr.mxu0 0.0
    %258 = vmatpush1.xpose.msra.mxu0 0.0
    %259 = vmatprep.subr.mxu0 0.0
    %260 = vmatpush1.xpose.msra.mxu0 0.0
    %261 = vmatprep.subr.mxu0 0.0
    %262 = vmatpush1.xpose.msra.mxu0 0.0
    %263 = vmatprep.subr.mxu0 0.0
    %264 = vmatpush1.xpose.msra.mxu0 0.0
    %265 = vmatprep.subr.mxu0 0.0
    %266 = vmatpush1.xpose.msra.mxu0 0.0
    %267 = vmatprep.subr.mxu0 0.0
    %268 = vmatpush1.xpose.msra.mxu0 0.0
    %269 = vmatprep.subr.mxu0 0.0
    %270 = vmatpush1.xpose.msra.mxu0 0.0
    %271 = vmatprep.subr.mxu0 0.0
    %272 = vmatpush1.xpose.msra.mxu0 0.0
    %273 = vmatprep.subr.mxu0 0.0
    %274 = vmatpush1.xpose.msra.mxu0 0.0
    %275 = vmatprep.subr.mxu0 0.0
    %276 = vmatpush1.xpose.msra.mxu0 0.0
    %277 = vmatprep.subr.mxu0 0.0
    %278 = vmatpush1.xpose.msra.mxu0 0.0
    %279 = vmatprep.subr.mxu0 0.0
    %280 = vmatpush1.xpose.msra.mxu0 0.0
    %281 = vmatprep.subr.mxu0 0.0
    %282 = vmatpush1.xpose.msra.mxu0 0.0
    %283 = vmatprep.mubr.f32.mxu0 0.0
    %284 = vmatmul.mubr.f32.gmra.mrb[0].mxu0 %v59
    %v285 = vpop.f32.mrb[0].mxu0
    %v286 = vadd.f32 0.0, %v285
    %v287 = vpop.f32.mrb[0].mxu0
    %288 = vmatprep.mubr.f32.mxu0 0.0
    %289 = vmatmul.mubr.f32.gmra.mrb[0].mxu0 %v60
    %v290 = vpop.f32.mrb[0].mxu0
    %v291 = vadd.f32 0.0, %v290
    %v292 = vpop.f32.mrb[0].mxu0
    %293 = vdwg.mxu0
    %294 = vmatprep.subr.mxu0 0.0
    %295 = vmatpush1.xpose.msra.mxu0 %v64
    %296 = vmatprep.subr.mxu0 0.0
    %297 = vmatpush1.xpose.msra.mxu0 0.0
    %298 = vmatprep.subr.mxu0 0.0
    %299 = vmatpush1.xpose.msra.mxu0 0.0
    %300 = vmatprep.subr.mxu0 0.0
    %301 = vmatpush1.xpose.msra.mxu0 0.0
    %302 = vmatprep.subr.mxu0 0.0
    %303 = vmatpush1.xpose.msra.mxu0 0.0
    %304 = vmatprep.subr.mxu0 0.0
    %305 = vmatpush1.xpose.msra.mxu0 0.0
    %306 = vmatprep.subr.mxu0 0.0
    %307 = vmatpush1.xpose.msra.mxu0 0.0
    %308 = vmatprep.subr.mxu0 0.0
    %309 = vmatpush1.xpose.msra.mxu0 0.0
    %310 = vmatprep.subr.mxu0 0.0
    %311 = vmatpush1.xpose.msra.mxu0 0.0
    %312 = vmatprep.subr.mxu0 0.0
    %313 = vmatpush1.xpose.msra.mxu0 0.0
    %314 = vmatprep.subr.mxu0 0.0
    %315 = vmatpush1.xpose.msra.mxu0 0.0
    %316 = vmatprep.subr.mxu0 0.0
    %317 = vmatpush1.xpose.msra.mxu0 0.0
    %318 = vmatprep.subr.mxu0 0.0
    %319 = vmatpush1.xpose.msra.mxu0 0.0
    %320 = vmatprep.subr.mxu0 0.0
    %321 = vmatpush1.xpose.msra.mxu0 0.0
    %322 = vmatprep.subr.mxu0 0.0
    %323 = vmatpush1.xpose.msra.mxu0 0.0
    %324 = vmatprep.subr.mxu0 0.0
    %325 = vmatpush1.xpose.msra.mxu0 0.0
    %326 = vmatprep.subr.mxu0 0.0
    %327 = vmatpush1.xpose.msra.mxu0 0.0
    %328 = vmatprep.subr.mxu0 0.0
    %329 = vmatpush1.xpose.msra.mxu0 0.0
    %330 = vmatprep.subr.mxu0 0.0
    %331 = vmatpush1.xpose.msra.mxu0 0.0
    %332 = vmatprep.subr.mxu0 0.0
    %333 = vmatpush1.xpose.msra.mxu0 0.0
    %334 = vmatprep.subr.mxu0 0.0
    %335 = vmatpush1.xpose.msra.mxu0 0.0
    %336 = vmatprep.subr.mxu0 0.0
    %337 = vmatpush1.xpose.msra.mxu0 0.0
    %338 = vmatprep.subr.mxu0 0.0
    %339 = vmatpush1.xpose.msra.mxu0 0.0
    %340 = vmatprep.subr.mxu0 0.0
    %341 = vmatpush1.xpose.msra.mxu0 0.0
    %342 = vmatprep.subr.mxu0 0.0
    %343 = vmatpush1.xpose.msra.mxu0 0.0
    %344 = vmatprep.subr.mxu0 0.0
    %345 = vmatpush1.xpose.msra.mxu0 0.0
    %346 = vmatprep.subr.mxu0 0.0
    %347 = vmatpush1.xpose.msra.mxu0 0.0
    %348 = vmatprep.subr.mxu0 0.0
    %349 = vmatpush1.xpose.msra.mxu0 0.0
    %350 = vmatprep.subr.mxu0 0.0
    %351 = vmatpush1.xpose.msra.mxu0 0.0
    %352 = vmatprep.subr.mxu0 0.0
    %353 = vmatpush1.xpose.msra.mxu0 0.0
    %354 = vmatprep.subr.mxu0 0.0
    %355 = vmatpush1.xpose.msra.mxu0 0.0
    %356 = vmatprep.subr.mxu0 0.0
    %357 = vmatpush1.xpose.msra.mxu0 0.0
    %358 = vmatprep.mubr.f32.mxu0 0.0
    %359 = vmatmul.mubr.f32.gmra.mrb[0].mxu0 %v59
    %v360 = vpop.f32.mrb[0].mxu0
    %v361 = vadd.f32 0.0, %v360
    %v362 = vpop.f32.mrb[0].mxu0
    %363 = vmatprep.mubr.f32.mxu0 0.0
    %364 = vmatmul.mubr.f32.gmra.mrb[0].mxu0 %v60
    %v365 = vpop.f32.mrb[0].mxu0
    %v366 = vadd.f32 0.0, %v365
    %v367 = vpop.f32.mrb[0].mxu0
    %368 = vdwg.mxu0
    %369 = vmatprep.subr.mxu0 0.0
    %370 = vmatpush1.xpose.msra.mxu0 %v65
    %371 = vmatprep.subr.mxu0 0.0
    %372 = vmatpush1.xpose.msra.mxu0 0.0
    %373 = vmatprep.subr.mxu0 0.0
    %374 = vmatpush1.xpose.msra.mxu0 0.0
    %375 = vmatprep.subr.mxu0 0.0
    %376 = vmatpush1.xpose.msra.mxu0 0.0
    %377 = vmatprep.subr.mxu0 0.0
    %378 = vmatpush1.xpose.msra.mxu0 0.0
    %379 = vmatprep.subr.mxu0 0.0
    %380 = vmatpush1.xpose.msra.mxu0 0.0
    %381 = vmatprep.subr.mxu0 0.0
    %382 = vmatpush1.xpose.msra.mxu0 0.0
    %383 = vmatprep.subr.mxu0 0.0
    %384 = vmatpush1.xpose.msra.mxu0 0.0
    %385 = vmatprep.subr.mxu0 0.0
    %386 = vmatpush1.xpose.msra.mxu0 0.0
    %387 = vmatprep.subr.mxu0 0.0
    %388 = vmatpush1.xpose.msra.mxu0 0.0
    %389 = vmatprep.subr.mxu0 0.0
    %390 = vmatpush1.xpose.msra.mxu0 0.0
    %391 = vmatprep.subr.mxu0 0.0
    %392 = vmatpush1.xpose.msra.mxu0 0.0
    %393 = vmatprep.subr.mxu0 0.0
    %394 = vmatpush1.xpose.msra.mxu0 0.0
    %395 = vmatprep.subr.mxu0 0.0
    %396 = vmatpush1.xpose.msra.mxu0 0.0
    %397 = vmatprep.subr.mxu0 0.0
    %398 = vmatpush1.xpose.msra.mxu0 0.0
    %399 = vmatprep.subr.mxu0 0.0
    %400 = vmatpush1.xpose.msra.mxu0 0.0
    %401 = vmatprep.subr.mxu0 0.0
    %402 = vmatpush1.xpose.msra.mxu0 0.0
    %403 = vmatprep.subr.mxu0 0.0
    %404 = vmatpush1.xpose.msra.mxu0 0.0
    %405 = vmatprep.subr.mxu0 0.0
    %406 = vmatpush1.xpose.msra.mxu0 0.0
    %407 = vmatprep.subr.mxu0 0.0
    %408 = vmatpush1.xpose.msra.mxu0 0.0
    %409 = vmatprep.subr.mxu0 0.0
    %410 = vmatpush1.xpose.msra.mxu0 0.0
    %411 = vmatprep.subr.mxu0 0.0
    %412 = vmatpush1.xpose.msra.mxu0 0.0
    %413 = vmatprep.subr.mxu0 0.0
    %414 = vmatpush1.xpose.msra.mxu0 0.0
    %415 = vmatprep.subr.mxu0 0.0
    %416 = vmatpush1.xpose.msra.mxu0 0.0
    %417 = vmatprep.subr.mxu0 0.0
    %418 = vmatpush1.xpose.msra.mxu0 0.0
    %419 = vmatprep.subr.mxu0 0.0
    %420 = vmatpush1.xpose.msra.mxu0 0.0
    %421 = vmatprep.subr.mxu0 0.0
    %422 = vmatpush1.xpose.msra.mxu0 0.0
    %423 = vmatprep.subr.mxu0 0.0
    %424 = vmatpush1.xpose.msra.mxu0 0.0
    %425 = vmatprep.subr.mxu0 0.0
    %426 = vmatpush1.xpose.msra.mxu0 0.0
    %427 = vmatprep.subr.mxu0 0.0
    %428 = vmatpush1.xpose.msra.mxu0 0.0
    %429 = vmatprep.subr.mxu0 0.0
    %430 = vmatpush1.xpose.msra.mxu0 0.0
    %431 = vmatprep.subr.mxu0 0.0
    %432 = vmatpush1.xpose.msra.mxu0 0.0
    %433 = vmatprep.mubr.f32.mxu0 0.0
    %434 = vmatmul.mubr.f32.gmra.mrb[0].mxu0 %v59
    %v435 = vpop.f32.mrb[0].mxu0
    %v436 = vadd.f32 0.0, %v435
    %v437 = vpop.f32.mrb[0].mxu0
    %438 = vmatprep.mubr.f32.mxu0 0.0
    %439 = vmatmul.mubr.f32.gmra.mrb[0].mxu0 %v60
    %v440 = vpop.f32.mrb[0].mxu0
    %v441 = vadd.f32 0.0, %v440
    %v442 = vpop.f32.mrb[0].mxu0
    %443 = vdwg.mxu0
    %444 = vmatprep.subr.mxu0 0.0
    %445 = vmatpush1.xpose.msra.mxu0 %v66
    %446 = vmatprep.subr.mxu0 0.0
    %447 = vmatpush1.xpose.msra.mxu0 0.0
    %448 = vmatprep.subr.mxu0 0.0
    %449 = vmatpush1.xpose.msra.mxu0 0.0
    %450 = vmatprep.subr.mxu0 0.0
    %451 = vmatpush1.xpose.msra.mxu0 0.0
    %452 = vmatprep.subr.mxu0 0.0
    %453 = vmatpush1.xpose.msra.mxu0 0.0
    %454 = vmatprep.subr.mxu0 0.0
    %455 = vmatpush1.xpose.msra.mxu0 0.0
    %456 = vmatprep.subr.mxu0 0.0
    %457 = vmatpush1.xpose.msra.mxu0 0.0
    %458 = vmatprep.subr.mxu0 0.0
    %459 = vmatpush1.xpose.msra.mxu0 0.0
    %460 = vmatprep.subr.mxu0 0.0
    %461 = vmatpush1.xpose.msra.mxu0 0.0
    %462 = vmatprep.subr.mxu0 0.0
    %463 = vmatpush1.xpose.msra.mxu0 0.0
    %464 = vmatprep.subr.mxu0 0.0
    %465 = vmatpush1.xpose.msra.mxu0 0.0
    %466 = vmatprep.subr.mxu0 0.0
    %467 = vmatpush1.xpose.msra.mxu0 0.0
    %468 = vmatprep.subr.mxu0 0.0
    %469 = vmatpush1.xpose.msra.mxu0 0.0
    %470 = vmatprep.subr.mxu0 0.0
    %471 = vmatpush1.xpose.msra.mxu0 0.0
    %472 = vmatprep.subr.mxu0 0.0
    %473 = vmatpush1.xpose.msra.mxu0 0.0
    %474 = vmatprep.subr.mxu0 0.0
    %475 = vmatpush1.xpose.msra.mxu0 0.0
    %476 = vmatprep.subr.mxu0 0.0
    %477 = vmatpush1.xpose.msra.mxu0 0.0
    %478 = vmatprep.subr.mxu0 0.0
    %479 = vmatpush1.xpose.msra.mxu0 0.0
    %480 = vmatprep.subr.mxu0 0.0
    %481 = vmatpush1.xpose.msra.mxu0 0.0
    %482 = vmatprep.subr.mxu0 0.0
    %483 = vmatpush1.xpose.msra.mxu0 0.0
    %484 = vmatprep.subr.mxu0 0.0
    %485 = vmatpush1.xpose.msra.mxu0 0.0
    %486 = vmatprep.subr.mxu0 0.0
    %487 = vmatpush1.xpose.msra.mxu0 0.0
    %488 = vmatprep.subr.mxu0 0.0
    %489 = vmatpush1.xpose.msra.mxu0 0.0
    %490 = vmatprep.subr.mxu0 0.0
    %491 = vmatpush1.xpose.msra.mxu0 0.0
    %492 = vmatprep.subr.mxu0 0.0
    %493 = vmatpush1.xpose.msra.mxu0 0.0
    %494 = vmatprep.subr.mxu0 0.0
    %495 = vmatpush1.xpose.msra.mxu0 0.0
    %496 = vmatprep.subr.mxu0 0.0
    %497 = vmatpush1.xpose.msra.mxu0 0.0
    %498 = vmatprep.subr.mxu0 0.0
    %499 = vmatpush1.xpose.msra.mxu0 0.0
    %500 = vmatprep.subr.mxu0 0.0
    %501 = vmatpush1.xpose.msra.mxu0 0.0
    %502 = vmatprep.subr.mxu0 0.0
    %503 = vmatpush1.xpose.msra.mxu0 0.0
    %504 = vmatprep.subr.mxu0 0.0
    %505 = vmatpush1.xpose.msra.mxu0 0.0
    %506 = vmatprep.subr.mxu0 0.0
    %507 = vmatpush1.xpose.msra.mxu0 0.0
    %508 = vmatprep.mubr.f32.mxu0 0.0
    %509 = vmatmul.mubr.f32.gmra.mrb[0].mxu0 %v59
    %v510 = vpop.f32.mrb[0].mxu0
    %v511 = vadd.f32 0.0, %v510
    %v512 = vpop.f32.mrb[0].mxu0
    %513 = vmatprep.mubr.f32.mxu0 0.0
    %514 = vmatmul.mubr.f32.gmra.mrb[0].mxu0 %v60
    %v515 = vpop.f32.mrb[0].mxu0
    %v516 = vadd.f32 0.0, %v515
    %v517 = vpop.f32.mrb[0].mxu0
    %518 = vdwg.mxu0
    %519 = vmatprep.subr.mxu0 0.0
    %520 = vmatpush1.xpose.msra.mxu0 %v67
    %521 = vmatprep.subr.mxu0 0.0
    %522 = vmatpush1.xpose.msra.mxu0 0.0
    %523 = vmatprep.subr.mxu0 0.0
    %524 = vmatpush1.xpose.msra.mxu0 0.0
    %525 = vmatprep.subr.mxu0 0.0
    %526 = vmatpush1.xpose.msra.mxu0 0.0
    %527 = vmatprep.subr.mxu0 0.0
    %528 = vmatpush1.xpose.msra.mxu0 0.0
    %529 = vmatprep.subr.mxu0 0.0
    %530 = vmatpush1.xpose.msra.mxu0 0.0
    %531 = vmatprep.subr.mxu0 0.0
    %532 = vmatpush1.xpose.msra.mxu0 0.0
    %533 = vmatprep.subr.mxu0 0.0
    %534 = vmatpush1.xpose.msra.mxu0 0.0
    %535 = vmatprep.subr.mxu0 0.0
    %536 = vmatpush1.xpose.msra.mxu0 0.0
    %537 = vmatprep.subr.mxu0 0.0
    %538 = vmatpush1.xpose.msra.mxu0 0.0
    %539 = vmatprep.subr.mxu0 0.0
    %540 = vmatpush1.xpose.msra.mxu0 0.0
    %541 = vmatprep.subr.mxu0 0.0
    %542 = vmatpush1.xpose.msra.mxu0 0.0
    %543 = vmatprep.subr.mxu0 0.0
    %544 = vmatpush1.xpose.msra.mxu0 0.0
    %545 = vmatprep.subr.mxu0 0.0
    %546 = vmatpush1.xpose.msra.mxu0 0.0
    %547 = vmatprep.subr.mxu0 0.0
    %548 = vmatpush1.xpose.msra.mxu0 0.0
    %549 = vmatprep.subr.mxu0 0.0
    %550 = vmatpush1.xpose.msra.mxu0 0.0
    %551 = vmatprep.subr.mxu0 0.0
    %552 = vmatpush1.xpose.msra.mxu0 0.0
    %553 = vmatprep.subr.mxu0 0.0
    %554 = vmatpush1.xpose.msra.mxu0 0.0
    %555 = vmatprep.subr.mxu0 0.0
    %556 = vmatpush1.xpose.msra.mxu0 0.0
    %557 = vmatprep.subr.mxu0 0.0
    %558 = vmatpush1.xpose.msra.mxu0 0.0
    %559 = vmatprep.subr.mxu0 0.0
    %560 = vmatpush1.xpose.msra.mxu0 0.0
    %561 = vmatprep.subr.mxu0 0.0
    %562 = vmatpush1.xpose.msra.mxu0 0.0
    %563 = vmatprep.subr.mxu0 0.0
    %564 = vmatpush1.xpose.msra.mxu0 0.0
    %565 = vmatprep.subr.mxu0 0.0
    %566 = vmatpush1.xpose.msra.mxu0 0.0
    %567 = vmatprep.subr.mxu0 0.0
    %568 = vmatpush1.xpose.msra.mxu0 0.0
    %569 = vmatprep.subr.mxu0 0.0
    %570 = vmatpush1.xpose.msra.mxu0 0.0
    %571 = vmatprep.subr.mxu0 0.0
    %572 = vmatpush1.xpose.msra.mxu0 0.0
    %573 = vmatprep.subr.mxu0 0.0
    %574 = vmatpush1.xpose.msra.mxu0 0.0
    %575 = vmatprep.subr.mxu0 0.0
    %576 = vmatpush1.xpose.msra.mxu0 0.0
    %577 = vmatprep.subr.mxu0 0.0
    %578 = vmatpush1.xpose.msra.mxu0 0.0
    %579 = vmatprep.subr.mxu0 0.0
    %580 = vmatpush1.xpose.msra.mxu0 0.0
    %581 = vmatprep.subr.mxu0 0.0
    %582 = vmatpush1.xpose.msra.mxu0 0.0
    %583 = vmatprep.mubr.f32.mxu0 0.0
    %584 = vmatmul.mubr.f32.gmra.mrb[0].mxu0 %v59
    %v585 = vpop.f32.mrb[0].mxu0
    %v586 = vadd.f32 0.0, %v585
    %v587 = vpop.f32.mrb[0].mxu0
    %588 = vmatprep.mubr.f32.mxu0 0.0
    %589 = vmatmul.mubr.f32.gmra.mrb[0].mxu0 %v60
    %v590 = vpop.f32.mrb[0].mxu0
    %v591 = vadd.f32 0.0, %v590
    %v592 = vpop.f32.mrb[0].mxu0
    %593 = vdwg.mxu0
    %594 = vmatprep.subr.mxu0 0.0
    %595 = vmatpush1.xpose.msra.mxu0 %v68
    %596 = vmatprep.subr.mxu0 0.0
    %597 = vmatpush1.xpose.msra.mxu0 0.0
    %598 = vmatprep.subr.mxu0 0.0
    %599 = vmatpush1.xpose.msra.mxu0 0.0
    %600 = vmatprep.subr.mxu0 0.0
    %601 = vmatpush1.xpose.msra.mxu0 0.0
    %602 = vmatprep.subr.mxu0 0.0
    %603 = vmatpush1.xpose.msra.mxu0 0.0
    %604 = vmatprep.subr.mxu0 0.0
    %605 = vmatpush1.xpose.msra.mxu0 0.0
    %606 = vmatprep.subr.mxu0 0.0
    %607 = vmatpush1.xpose.msra.mxu0 0.0
    %608 = vmatprep.subr.mxu0 0.0
    %609 = vmatpush1.xpose.msra.mxu0 0.0
    %610 = vmatprep.subr.mxu0 0.0
    %611 = vmatpush1.xpose.msra.mxu0 0.0
    %612 = vmatprep.subr.mxu0 0.0
    %613 = vmatpush1.xpose.msra.mxu0 0.0
    %614 = vmatprep.subr.mxu0 0.0
    %615 = vmatpush1.xpose.msra.mxu0 0.0
    %616 = vmatprep.subr.mxu0 0.0
    %617 = vmatpush1.xpose.msra.mxu0 0.0
    %618 = vmatprep.subr.mxu0 0.0
    %619 = vmatpush1.xpose.msra.mxu0 0.0
    %620 = vmatprep.subr.mxu0 0.0
    %621 = vmatpush1.xpose.msra.mxu0 0.0
    %622 = vmatprep.subr.mxu0 0.0
    %623 = vmatpush1.xpose.msra.mxu0 0.0
    %624 = vmatprep.subr.mxu0 0.0
    %625 = vmatpush1.xpose.msra.mxu0 0.0
    %626 = vmatprep.subr.mxu0 0.0
    %627 = vmatpush1.xpose.msra.mxu0 0.0
    %628 = vmatprep.subr.mxu0 0.0
    %629 = vmatpush1.xpose.msra.mxu0 0.0
    %630 = vmatprep.subr.mxu0 0.0
    %631 = vmatpush1.xpose.msra.mxu0 0.0
    %632 = vmatprep.subr.mxu0 0.0
    %633 = vmatpush1.xpose.msra.mxu0 0.0
    %634 = vmatprep.subr.mxu0 0.0
    %635 = vmatpush1.xpose.msra.mxu0 0.0
    %636 = vmatprep.subr.mxu0 0.0
    %637 = vmatpush1.xpose.msra.mxu0 0.0
    %638 = vmatprep.subr.mxu0 0.0
    %639 = vmatpush1.xpose.msra.mxu0 0.0
    %640 = vmatprep.subr.mxu0 0.0
    %641 = vmatpush1.xpose.msra.mxu0 0.0
    %642 = vmatprep.subr.mxu0 0.0
    %643 = vmatpush1.xpose.msra.mxu0 0.0
    %644 = vmatprep.subr.mxu0 0.0
    %645 = vmatpush1.xpose.msra.mxu0 0.0
    %646 = vmatprep.subr.mxu0 0.0
    %647 = vmatpush1.xpose.msra.mxu0 0.0
    %648 = vmatprep.subr.mxu0 0.0
    %649 = vmatpush1.xpose.msra.mxu0 0.0
    %650 = vmatprep.subr.mxu0 0.0
    %651 = vmatpush1.xpose.msra.mxu0 0.0
    %652 = vmatprep.subr.mxu0 0.0
    %653 = vmatpush1.xpose.msra.mxu0 0.0
    %654 = vmatprep.subr.mxu0 0.0
    %655 = vmatpush1.xpose.msra.mxu0 0.0
    %656 = vmatprep.subr.mxu0 0.0
    %657 = vmatpush1.xpose.msra.mxu0 0.0
    %658 = vmatprep.mubr.f32.mxu0 0.0
    %659 = vmatmul.mubr.f32.gmra.mrb[0].mxu0 %v59
    %v660 = vpop.f32.mrb[0].mxu0
    %v661 = vadd.f32 0.0, %v660
    %v662 = vpop.f32.mrb[0].mxu0
    %663 = vmatprep.mubr.f32.mxu0 0.0
    %664 = vmatmul.mubr.f32.gmra.mrb[0].mxu0 %v60
    %v665 = vpop.f32.mrb[0].mxu0
    %v666 = vadd.f32 0.0, %v665
    %v667 = vpop.f32.mrb[0].mxu0
    %668 = vdwg.mxu0
    %v669 = vld [vmem:[#allocation7] sm:$0xff]
    %v670 = vld [vmem:[#allocation7 + $0x8] sm:$0xff]
    %v671 = vld [vmem:[#allocation7 + $0x10] sm:$0xff]
    %v672 = vld [vmem:[#allocation7 + $0x18] sm:$0xff]
    %v673 = vld [vmem:[#allocation7 + $0x20] sm:$0xff]
    %v674 = vld [vmem:[#allocation7 + $0x28] sm:$0xff]
    %v675 = vld [vmem:[#allocation7 + $0x30] sm:$0xff]
    %v676 = vld [vmem:[#allocation7 + $0x38] sm:$0xff]
    %v677 = vld [vmem:[#allocation7 + $0x40] sm:$0xff]
    %v678 = vld [vmem:[#allocation7 + $0x48] sm:$0xff]
    %v679 = vld [vmem:[#allocation7 + $0x50] sm:$0xff]
    %v680 = vld [vmem:[#allocation7 + $0x58] sm:$0xff]
    %v681 = vld [vmem:[#allocation7 + $0x60] sm:$0xff]
    %v682 = vld [vmem:[#allocation7 + $0x68] sm:$0xff]
    %v683 = vld [vmem:[#allocation7 + $0x70] sm:$0xff]
    %v684 = vld [vmem:[#allocation7 + $0x78] sm:$0xff]
    %v685 = vld [vmem:[#allocation7 + $0x80] sm:$0xff]
    %v686 = vld [vmem:[#allocation7 + $0x88] sm:$0xff]
    %v687 = vld [vmem:[#allocation7 + $0x90] sm:$0xff]
    %v688 = vld [vmem:[#allocation7 + $0x98] sm:$0xff]
    %v689 = vld [vmem:[#allocation7 + $0xa0] sm:$0xff]
    %v690 = vld [vmem:[#allocation7 + $0xa8] sm:$0xff]
    %v691 = vld [vmem:[#allocation7 + $0xb0] sm:$0xff]
    %v692 = vld [vmem:[#allocation7 + $0xb8] sm:$0xff]
    %v693 = vld [vmem:[#allocation7 + $0xc0] sm:$0xff]
    %v694 = vld [vmem:[#allocation7 + $0xc8] sm:$0xff]
    %v695 = vld [vmem:[#allocation7 + $0xd0] sm:$0xff]
    %v696 = vld [vmem:[#allocation7 + $0xd8] sm:$0xff]
    %v697 = vld [vmem:[#allocation7 + $0xe0] sm:$0xff]
    %v698 = vld [vmem:[#allocation7 + $0xe8] sm:$0xff]
    %v699 = vld [vmem:[#allocation7 + $0xf0] sm:$0xff]
    %v700 = vld [vmem:[#allocation7 + $0xf8] sm:$0xff]
    %v701 = vld [vmem:[#allocation7 + $0x100] sm:$0xff]
    %v702 = vld [vmem:[#allocation7 + $0x108] sm:$0xff]
    %v703 = vld [vmem:[#allocation7 + $0x110] sm:$0xff]
    %v704 = vld [vmem:[#allocation7 + $0x118] sm:$0xff]
    %v705 = vld [vmem:[#allocation7 + $0x120] sm:$0xff]
    %v706 = vld [vmem:[#allocation7 + $0x128] sm:$0xff]
    %v707 = vld [vmem:[#allocation7 + $0x130] sm:$0xff]
    %v708 = vld [vmem:[#allocation7 + $0x138] sm:$0xff]
    %v709 = vld [vmem:[#allocation7 + $0x140] sm:$0xff]
    %v710 = vld [vmem:[#allocation7 + $0x148] sm:$0xff]
    %v711 = vld [vmem:[#allocation7 + $0x150] sm:$0xff]
    %v712 = vld [vmem:[#allocation7 + $0x158] sm:$0xff]
    %v713 = vld [vmem:[#allocation7 + $0x160] sm:$0xff]
    %v714 = vld [vmem:[#allocation7 + $0x168] sm:$0xff]
    %v715 = vld [vmem:[#allocation7 + $0x170] sm:$0xff]
    %v716 = vld [vmem:[#allocation7 + $0x178] sm:$0xff]
    %v717 = vld [vmem:[#allocation7 + $0x180] sm:$0xff]
    %v718 = vld [vmem:[#allocation7 + $0x188] sm:$0xff]
    %v719 = vld [vmem:[#allocation7 + $0x190] sm:$0xff]
    %v720 = vld [vmem:[#allocation7 + $0x198] sm:$0xff]
    %v721 = vld [vmem:[#allocation7 + $0x1a0] sm:$0xff]
    %v722 = vld [vmem:[#allocation7 + $0x1a8] sm:$0xff]
    %v723 = vld [vmem:[#allocation7 + $0x1b0] sm:$0xff]
    %v724 = vld [vmem:[#allocation7 + $0x1b8] sm:$0xff]
    %v725 = vld [vmem:[#allocation7 + $0x1c0] sm:$0xff]
    %v726 = vld [vmem:[#allocation7 + $0x1c8] sm:$0xff]
    %v727 = vld [vmem:[#allocation7 + $0x1d0] sm:$0xff]
    %v728 = vld [vmem:[#allocation7 + $0x1d8] sm:$0xff]
    %v729 = vld [vmem:[#allocation7 + $0x1e0] sm:$0xff]
    %v730 = vld [vmem:[#allocation7 + $0x1e8] sm:$0xff]
    %v731 = vld [vmem:[#allocation7 + $0x1f0] sm:$0xff]
    %v732 = vld [vmem:[#allocation7 + $0x1f8] sm:$0xff]
    %733 = vmatprep.subr.mxu0 0.0
    %734 = vmatpush1.msra.mxu0 %v669
    %735 = vmatprep.subr.mxu0 0.0
    %736 = vmatpush1.msra.mxu0 %v670
    %737 = vmatprep.subr.mxu0 0.0
    %738 = vmatpush1.msra.mxu0 %v671
    %739 = vmatprep.subr.mxu0 0.0
    %740 = vmatpush1.msra.mxu0 %v672
    %741 = vmatprep.subr.mxu0 0.0
    %742 = vmatpush1.msra.mxu0 %v673
    %743 = vmatprep.subr.mxu0 0.0
    %744 = vmatpush1.msra.mxu0 %v674
    %745 = vmatprep.subr.mxu0 0.0
    %746 = vmatpush1.msra.mxu0 %v675
    %747 = vmatprep.subr.mxu0 0.0
    %748 = vmatpush1.msra.mxu0 %v676
    %749 = vmatprep.subr.mxu0 0.0
    %750 = vmatpush1.msra.mxu0 %v677
    %751 = vmatprep.subr.mxu0 0.0
    %752 = vmatpush1.msra.mxu0 %v678
    %753 = vmatprep.subr.mxu0 0.0
    %754 = vmatpush1.msra.mxu0 %v679
    %755 = vmatprep.subr.mxu0 0.0
    %756 = vmatpush1.msra.mxu0 %v680
    %757 = vmatprep.subr.mxu0 0.0
    %758 = vmatpush1.msra.mxu0 %v681
    %759 = vmatprep.subr.mxu0 0.0
    %760 = vmatpush1.msra.mxu0 %v682
    %761 = vmatprep.subr.mxu0 0.0
    %762 = vmatpush1.msra.mxu0 %v683
    %763 = vmatprep.subr.mxu0 0.0
    %764 = vmatpush1.msra.mxu0 %v684
    %765 = vmatprep.subr.mxu0 0.0
    %766 = vmatpush1.msra.mxu0 0.0
    %767 = vmatprep.subr.mxu0 0.0
    %768 = vmatpush1.msra.mxu0 0.0
    %769 = vmatprep.subr.mxu0 0.0
    %770 = vmatpush1.msra.mxu0 0.0
    %771 = vmatprep.subr.mxu0 0.0
    %772 = vmatpush1.msra.mxu0 0.0
    %773 = vmatprep.subr.mxu0 0.0
    %774 = vmatpush1.msra.mxu0 0.0
    %775 = vmatprep.subr.mxu0 0.0
    %776 = vmatpush1.msra.mxu0 0.0
    %777 = vmatprep.subr.mxu0 0.0
    %778 = vmatpush1.msra.mxu0 0.0
    %779 = vmatprep.subr.mxu0 0.0
    %780 = vmatpush1.msra.mxu0 0.0
    %781 = vmatprep.subr.mxu0 0.0
    %782 = vmatpush1.msra.mxu0 0.0
    %783 = vmatprep.subr.mxu0 0.0
    %784 = vmatpush1.msra.mxu0 0.0
    %785 = vmatprep.subr.mxu0 0.0
    %786 = vmatpush1.msra.mxu0 0.0
    %787 = vmatprep.subr.mxu0 0.0
    %788 = vmatpush1.msra.mxu0 0.0
    %789 = vmatprep.subr.mxu0 0.0
    %790 = vmatpush1.msra.mxu0 0.0
    %791 = vmatprep.subr.mxu0 0.0
    %792 = vmatpush1.msra.mxu0 0.0
    %793 = vmatprep.subr.mxu0 0.0
    %794 = vmatpush1.msra.mxu0 0.0
    %795 = vmatprep.subr.mxu0 0.0
    %796 = vmatpush1.msra.mxu0 0.0
    %797 = vmatprep.mubr.f32.mxu0 0.0
    %798 = vmatmul.mubr.f32.gmra.mrb[0].mxu0 %v59
    %v799 = vpop.f32.mrb[0].mxu0
    %v800 = vadd.f32 0.0, %v799
    %v801 = vpop.f32.mrb[0].mxu0
    %802 = vmatprep.mubr.f32.mxu0 0.0
    %803 = vmatmul.mubr.f32.gmra.mrb[0].mxu0 %v60
    %v804 = vpop.f32.mrb[0].mxu0
    %v805 = vadd.f32 0.0, %v804
    %v806 = vpop.f32.mrb[0].mxu0
    %807 = vdwg.mxu0
    %808 = vmatprep.subr.mxu0 0.0
    %809 = vmatpush1.msra.mxu0 %v685
    %810 = vmatprep.subr.mxu0 0.0
    %811 = vmatpush1.msra.mxu0 %v686
    %812 = vmatprep.subr.mxu0 0.0
    %813 = vmatpush1.msra.mxu0 %v687
    %814 = vmatprep.subr.mxu0 0.0
    %815 = vmatpush1.msra.mxu0 %v688
    %816 = vmatprep.subr.mxu0 0.0
    %817 = vmatpush1.msra.mxu0 %v689
    %818 = vmatprep.subr.mxu0 0.0
    %819 = vmatpush1.msra.mxu0 %v690
    %820 = vmatprep.subr.mxu0 0.0
    %821 = vmatpush1.msra.mxu0 %v691
    %822 = vmatprep.subr.mxu0 0.0
    %823 = vmatpush1.msra.mxu0 %v692
    %824 = vmatprep.subr.mxu0 0.0
    %825 = vmatpush1.msra.mxu0 %v693
    %826 = vmatprep.subr.mxu0 0.0
    %827 = vmatpush1.msra.mxu0 %v694
    %828 = vmatprep.subr.mxu0 0.0
    %829 = vmatpush1.msra.mxu0 %v695
    %830 = vmatprep.subr.mxu0 0.0
    %831 = vmatpush1.msra.mxu0 %v696
    %832 = vmatprep.subr.mxu0 0.0
    %833 = vmatpush1.msra.mxu0 %v697
    %834 = vmatprep.subr.mxu0 0.0
    %835 = vmatpush1.msra.mxu0 %v698
    %836 = vmatprep.subr.mxu0 0.0
    %837 = vmatpush1.msra.mxu0 %v699
    %838 = vmatprep.subr.mxu0 0.0
    %839 = vmatpush1.msra.mxu0 %v700
    %840 = vmatprep.subr.mxu0 0.0
    %841 = vmatpush1.msra.mxu0 0.0
    %842 = vmatprep.subr.mxu0 0.0
    %843 = vmatpush1.msra.mxu0 0.0
    %844 = vmatprep.subr.mxu0 0.0
    %845 = vmatpush1.msra.mxu0 0.0
    %846 = vmatprep.subr.mxu0 0.0
    %847 = vmatpush1.msra.mxu0 0.0
    %848 = vmatprep.subr.mxu0 0.0
    %849 = vmatpush1.msra.mxu0 0.0
    %850 = vmatprep.subr.mxu0 0.0
    %851 = vmatpush1.msra.mxu0 0.0
    %852 = vmatprep.subr.mxu0 0.0
    %853 = vmatpush1.msra.mxu0 0.0
    %854 = vmatprep.subr.mxu0 0.0
    %855 = vmatpush1.msra.mxu0 0.0
    %856 = vmatprep.subr.mxu0 0.0
    %857 = vmatpush1.msra.mxu0 0.0
    %858 = vmatprep.subr.mxu0 0.0
    %859 = vmatpush1.msra.mxu0 0.0
    %860 = vmatprep.subr.mxu0 0.0
    %861 = vmatpush1.msra.mxu0 0.0
    %862 = vmatprep.subr.mxu0 0.0
    %863 = vmatpush1.msra.mxu0 0.0
    %864 = vmatprep.subr.mxu0 0.0
    %865 = vmatpush1.msra.mxu0 0.0
    %866 = vmatprep.subr.mxu0 0.0
    %867 = vmatpush1.msra.mxu0 0.0
    %868 = vmatprep.subr.mxu0 0.0
    %869 = vmatpush1.msra.mxu0 0.0
    %870 = vmatprep.subr.mxu0 0.0
    %871 = vmatpush1.msra.mxu0 0.0
    %872 = vmatprep.mubr.f32.mxu0 0.0
    %873 = vmatmul.mubr.f32.gmra.mrb[0].mxu0 %v59
    %v874 = vpop.f32.mrb[0].mxu0
    %v875 = vadd.f32 0.0, %v874
    %v876 = vpop.f32.mrb[0].mxu0
    %877 = vmatprep.mubr.f32.mxu0 0.0
    %878 = vmatmul.mubr.f32.gmra.mrb[0].mxu0 %v60
    %v879 = vpop.f32.mrb[0].mxu0
    %v880 = vadd.f32 0.0, %v879
    %v881 = vpop.f32.mrb[0].mxu0
    %882 = vdwg.mxu0
    %883 = vmatprep.subr.mxu0 0.0
    %884 = vmatpush1.msra.mxu0 %v701
    %885 = vmatprep.subr.mxu0 0.0
    %886 = vmatpush1.msra.mxu0 %v702
    %887 = vmatprep.subr.mxu0 0.0
    %888 = vmatpush1.msra.mxu0 %v703
    %889 = vmatprep.subr.mxu0 0.0
    %890 = vmatpush1.msra.mxu0 %v704
    %891 = vmatprep.subr.mxu0 0.0
    %892 = vmatpush1.msra.mxu0 %v705
    %893 = vmatprep.subr.mxu0 0.0
    %894 = vmatpush1.msra.mxu0 %v706
    %895 = vmatprep.subr.mxu0 0.0
    %896 = vmatpush1.msra.mxu0 %v707
    %897 = vmatprep.subr.mxu0 0.0
    %898 = vmatpush1.msra.mxu0 %v708
    %899 = vmatprep.subr.mxu0 0.0
    %900 = vmatpush1.msra.mxu0 %v709
    %901 = vmatprep.subr.mxu0 0.0
    %902 = vmatpush1.msra.mxu0 %v710
    %903 = vmatprep.subr.mxu0 0.0
    %904 = vmatpush1.msra.mxu0 %v711
    %905 = vmatprep.subr.mxu0 0.0
    %906 = vmatpush1.msra.mxu0 %v712
    %907 = vmatprep.subr.mxu0 0.0
    %908 = vmatpush1.msra.mxu0 %v713
    %909 = vmatprep.subr.mxu0 0.0
    %910 = vmatpush1.msra.mxu0 %v714
    %911 = vmatprep.subr.mxu0 0.0
    %912 = vmatpush1.msra.mxu0 %v715
    %913 = vmatprep.subr.mxu0 0.0
    %914 = vmatpush1.msra.mxu0 %v716
    %915 = vmatprep.subr.mxu0 0.0
    %916 = vmatpush1.msra.mxu0 0.0
    %917 = vmatprep.subr.mxu0 0.0
    %918 = vmatpush1.msra.mxu0 0.0
    %919 = vmatprep.subr.mxu0 0.0
    %920 = vmatpush1.msra.mxu0 0.0
    %921 = vmatprep.subr.mxu0 0.0
    %922 = vmatpush1.msra.mxu0 0.0
    %923 = vmatprep.subr.mxu0 0.0
    %924 = vmatpush1.msra.mxu0 0.0
    %925 = vmatprep.subr.mxu0 0.0
    %926 = vmatpush1.msra.mxu0 0.0
    %927 = vmatprep.subr.mxu0 0.0
    %928 = vmatpush1.msra.mxu0 0.0
    %929 = vmatprep.subr.mxu0 0.0
    %930 = vmatpush1.msra.mxu0 0.0
    %931 = vmatprep.subr.mxu0 0.0
    %932 = vmatpush1.msra.mxu0 0.0
    %933 = vmatprep.subr.mxu0 0.0
    %934 = vmatpush1.msra.mxu0 0.0
    %935 = vmatprep.subr.mxu0 0.0
    %936 = vmatpush1.msra.mxu0 0.0
    %937 = vmatprep.subr.mxu0 0.0
    %938 = vmatpush1.msra.mxu0 0.0
    %939 = vmatprep.subr.mxu0 0.0
    %940 = vmatpush1.msra.mxu0 0.0
    %941 = vmatprep.subr.mxu0 0.0
    %942 = vmatpush1.msra.mxu0 0.0
    %943 = vmatprep.subr.mxu0 0.0
    %944 = vmatpush1.msra.mxu0 0.0
    %945 = vmatprep.subr.mxu0 0.0
    %946 = vmatpush1.msra.mxu0 0.0
    %947 = vmatprep.mubr.f32.mxu0 0.0
    %948 = vmatmul.mubr.f32.gmra.mrb[0].mxu0 %v59
    %v949 = vpop.f32.mrb[0].mxu0
    %v950 = vadd.f32 0.0, %v949
    %v951 = vpop.f32.mrb[0].mxu0
    %952 = vmatprep.mubr.f32.mxu0 0.0
    %953 = vmatmul.mubr.f32.gmra.mrb[0].mxu0 %v60
    %v954 = vpop.f32.mrb[0].mxu0
    %v955 = vadd.f32 0.0, %v954
    %v956 = vpop.f32.mrb[0].mxu0
    %957 = vdwg.mxu0
    %958 = vmatprep.subr.mxu0 0.0
    %959 = vmatpush1.msra.mxu0 %v717
    %960 = vmatprep.subr.mxu0 0.0
    %961 = vmatpush1.msra.mxu0 %v718
    %962 = vmatprep.subr.mxu0 0.0
    %963 = vmatpush1.msra.mxu0 %v719
    %964 = vmatprep.subr.mxu0 0.0
    %965 = vmatpush1.msra.mxu0 %v720
    %966 = vmatprep.subr.mxu0 0.0
    %967 = vmatpush1.msra.mxu0 %v721
    %968 = vmatprep.subr.mxu0 0.0
    %969 = vmatpush1.msra.mxu0 %v722
    %970 = vmatprep.subr.mxu0 0.0
    %971 = vmatpush1.msra.mxu0 %v723
    %972 = vmatprep.subr.mxu0 0.0
    %973 = vmatpush1.msra.mxu0 %v724
    %974 = vmatprep.subr.mxu0 0.0
    %975 = vmatpush1.msra.mxu0 %v725
    %976 = vmatprep.subr.mxu0 0.0
    %977 = vmatpush1.msra.mxu0 %v726
    %978 = vmatprep.subr.mxu0 0.0
    %979 = vmatpush1.msra.mxu0 %v727
    %980 = vmatprep.subr.mxu0 0.0
    %981 = vmatpush1.msra.mxu0 %v728
    %982 = vmatprep.subr.mxu0 0.0
    %983 = vmatpush1.msra.mxu0 %v729
    %984 = vmatprep.subr.mxu0 0.0
    %985 = vmatpush1.msra.mxu0 %v730
    %986 = vmatprep.subr.mxu0 0.0
    %987 = vmatpush1.msra.mxu0 %v731
    %988 = vmatprep.subr.mxu0 0.0
    %989 = vmatpush1.msra.mxu0 %v732
    %990 = vmatprep.subr.mxu0 0.0
    %991 = vmatpush1.msra.mxu0 0.0
    %992 = vmatprep.subr.mxu0 0.0
    %993 = vmatpush1.msra.mxu0 0.0
    %994 = vmatprep.subr.mxu0 0.0
    %995 = vmatpush1.msra.mxu0 0.0
    %996 = vmatprep.subr.mxu0 0.0
    %997 = vmatpush1.msra.mxu0 0.0
    %998 = vmatprep.subr.mxu0 0.0
    %999 = vmatpush1.msra.mxu0 0.0
    %1000 = vmatprep.subr.mxu0 0.0
    %1001 = vmatpush1.msra.mxu0 0.0
    %1002 = vmatprep.subr.mxu0 0.0
    %1003 = vmatpush1.msra.mxu0 0.0
    %1004 = vmatprep.subr.mxu0 0.0
    %1005 = vmatpush1.msra.mxu0 0.0
    %1006 = vmatprep.subr.mxu0 0.0
    %1007 = vmatpush1.msra.mxu0 0.0
    %1008 = vmatprep.subr.mxu0 0.0
    %1009 = vmatpush1.msra.mxu0 0.0
    %1010 = vmatprep.subr.mxu0 0.0
    %1011 = vmatpush1.msra.mxu0 0.0
    %1012 = vmatprep.subr.mxu0 0.0
    %1013 = vmatpush1.msra.mxu0 0.0
    %1014 = vmatprep.subr.mxu0 0.0
    %1015 = vmatpush1.msra.mxu0 0.0
    %1016 = vmatprep.subr.mxu0 0.0
    %1017 = vmatpush1.msra.mxu0 0.0
    %1018 = vmatprep.subr.mxu0 0.0
    %1019 = vmatpush1.msra.mxu0 0.0
    %1020 = vmatprep.subr.mxu0 0.0
    %1021 = vmatpush1.msra.mxu0 0.0
    %1022 = vmatprep.mubr.f32.mxu0 0.0
    %1023 = vmatmul.mubr.f32.gmra.mrb[0].mxu0 %v59
    %v1024 = vpop.f32.mrb[0].mxu0
    %v1025 = vadd.f32 0.0, %v1024
    %v1026 = vpop.f32.mrb[0].mxu0
    %1027 = vmatprep.mubr.f32.mxu0 0.0
    %1028 = vmatmul.mubr.f32.gmra.mrb[0].mxu0 %v60
    %v1029 = vpop.f32.mrb[0].mxu0
    %v1030 = vadd.f32 0.0, %v1029
    %v1031 = vpop.f32.mrb[0].mxu0
    %1032 = vdwg.mxu0
    %v1033 = vlaneseq
    %v1034 = vshrl.u32 %v1033, 7
    %v1035 = vlaneseq
    %v1036 = vand.u32 %v1035, 127
    %vm1037 = vcmp.le.s32.totalorder %v1036, %v1034
    %v1038 = vsel %vm1037, 0.0, -1e+30
    %vm1039 = vcmask 64512
    %v1041 = vsel %vm1039, %v136, 0
    %v1044 = vsel %vm1039, %v436, 0
    %1046 = vmatprep.subr.mxu0 0.0
    %1047 = vmatpush1.xpose.msra.mxu0 %v1044
    %1048 = vmatprep.subr.mxu0 0.0
    %1049 = vmatpush1.xpose.msra.mxu0 0.0
    %1050 = vmatprep.subr.mxu0 0.0
    %1051 = vmatpush1.xpose.msra.mxu0 0.0
    %1052 = vmatprep.subr.mxu0 0.0
    %1053 = vmatpush1.xpose.msra.mxu0 0.0
    %1054 = vmatprep.subr.mxu0 0.0
    %1055 = vmatpush1.xpose.msra.mxu0 0.0
    %1056 = vmatprep.subr.mxu0 0.0
    %1057 = vmatpush1.xpose.msra.mxu0 0.0
    %1058 = vmatprep.subr.mxu0 0.0
    %1059 = vmatpush1.xpose.msra.mxu0 0.0
    %1060 = vmatprep.subr.mxu0 0.0
    %1061 = vmatpush1.xpose.msra.mxu0 0.0
    %1062 = vmatprep.subr.mxu0 0.0
    %1063 = vmatpush1.xpose.msra.mxu0 0.0
    %1064 = vmatprep.subr.mxu0 0.0
    %1065 = vmatpush1.xpose.msra.mxu0 0.0
    %1066 = vmatprep.subr.mxu0 0.0
    %1067 = vmatpush1.xpose.msra.mxu0 0.0
    %1068 = vmatprep.subr.mxu0 0.0
    %1069 = vmatpush1.xpose.msra.mxu0 0.0
    %1070 = vmatprep.subr.mxu0 0.0
    %1071 = vmatpush1.xpose.msra.mxu0 0.0
    %1072 = vmatprep.subr.mxu0 0.0
    %1073 = vmatpush1.xpose.msra.mxu0 0.0
    %1074 = vmatprep.subr.mxu0 0.0
    %1075 = vmatpush1.xpose.msra.mxu0 0.0
    %1076 = vmatprep.subr.mxu0 0.0
    %1077 = vmatpush1.xpose.msra.mxu0 0.0
    %1078 = vmatprep.subr.mxu0 0.0
    %1079 = vmatpush1.xpose.msra.mxu0 0.0
    %1080 = vmatprep.subr.mxu0 0.0
    %1081 = vmatpush1.xpose.msra.mxu0 0.0
    %1082 = vmatprep.subr.mxu0 0.0
    %1083 = vmatpush1.xpose.msra.mxu0 0.0
    %1084 = vmatprep.subr.mxu0 0.0
    %1085 = vmatpush1.xpose.msra.mxu0 0.0
    %1086 = vmatprep.subr.mxu0 0.0
    %1087 = vmatpush1.xpose.msra.mxu0 0.0
    %1088 = vmatprep.subr.mxu0 0.0
    %1089 = vmatpush1.xpose.msra.mxu0 0.0
    %1090 = vmatprep.subr.mxu0 0.0
    %1091 = vmatpush1.xpose.msra.mxu0 0.0
    %1092 = vmatprep.subr.mxu0 0.0
    %1093 = vmatpush1.xpose.msra.mxu0 0.0
    %1094 = vmatprep.subr.mxu0 0.0
    %1095 = vmatpush1.xpose.msra.mxu0 0.0
    %1096 = vmatprep.subr.mxu0 0.0
    %1097 = vmatpush1.xpose.msra.mxu0 0.0
    %1098 = vmatprep.subr.mxu0 0.0
    %1099 = vmatpush1.xpose.msra.mxu0 0.0
    %1100 = vmatprep.subr.mxu0 0.0
    %1101 = vmatpush1.xpose.msra.mxu0 0.0
    %1102 = vmatprep.subr.mxu0 0.0
    %1103 = vmatpush1.xpose.msra.mxu0 0.0
    %1104 = vmatprep.subr.mxu0 0.0
    %1105 = vmatpush1.xpose.msra.mxu0 0.0
    %1106 = vmatprep.subr.mxu0 0.0
    %1107 = vmatpush1.xpose.msra.mxu0 0.0
    %1108 = vmatprep.subr.mxu0 0.0
    %1109 = vmatpush1.xpose.msra.mxu0 0.0
    %1110 = vmatprep.mubr.f32.mxu0 0.0
    %1111 = vmatmul.mubr.f32.gmra.mrb[0].mxu0 %v1041
    %v1112 = vpop.f32.mrb[0].mxu0
    %v1113 = vadd.f32 %v1038, %v1112
    %v1114 = vpop.f32.mrb[0].mxu0
    %1115 = vdwg.mxu0
    %v1117 = vsel %vm1039, %v141, 0
    %v1120 = vsel %vm1039, %v441, 0
    %1122 = vmatprep.subr.mxu0 0.0
    %1123 = vmatpush1.xpose.msra.mxu0 %v1120
    %1124 = vmatprep.subr.mxu0 0.0
    %1125 = vmatpush1.xpose.msra.mxu0 0.0
    %1126 = vmatprep.subr.mxu0 0.0
    %1127 = vmatpush1.xpose.msra.mxu0 0.0
    %1128 = vmatprep.subr.mxu0 0.0
    %1129 = vmatpush1.xpose.msra.mxu0 0.0
    %1130 = vmatprep.subr.mxu0 0.0
    %1131 = vmatpush1.xpose.msra.mxu0 0.0
    %1132 = vmatprep.subr.mxu0 0.0
    %1133 = vmatpush1.xpose.msra.mxu0 0.0
    %1134 = vmatprep.subr.mxu0 0.0
    %1135 = vmatpush1.xpose.msra.mxu0 0.0
    %1136 = vmatprep.subr.mxu0 0.0
    %1137 = vmatpush1.xpose.msra.mxu0 0.0
    %1138 = vmatprep.subr.mxu0 0.0
    %1139 = vmatpush1.xpose.msra.mxu0 0.0
    %1140 = vmatprep.subr.mxu0 0.0
    %1141 = vmatpush1.xpose.msra.mxu0 0.0
    %1142 = vmatprep.subr.mxu0 0.0
    %1143 = vmatpush1.xpose.msra.mxu0 0.0
    %1144 = vmatprep.subr.mxu0 0.0
    %1145 = vmatpush1.xpose.msra.mxu0 0.0
    %1146 = vmatprep.subr.mxu0 0.0
    %1147 = vmatpush1.xpose.msra.mxu0 0.0
    %1148 = vmatprep.subr.mxu0 0.0
    %1149 = vmatpush1.xpose.msra.mxu0 0.0
    %1150 = vmatprep.subr.mxu0 0.0
    %1151 = vmatpush1.xpose.msra.mxu0 0.0
    %1152 = vmatprep.subr.mxu0 0.0
    %1153 = vmatpush1.xpose.msra.mxu0 0.0
    %1154 = vmatprep.subr.mxu0 0.0
    %1155 = vmatpush1.xpose.msra.mxu0 0.0
    %1156 = vmatprep.subr.mxu0 0.0
    %1157 = vmatpush1.xpose.msra.mxu0 0.0
    %1158 = vmatprep.subr.mxu0 0.0
    %1159 = vmatpush1.xpose.msra.mxu0 0.0
    %1160 = vmatprep.subr.mxu0 0.0
    %1161 = vmatpush1.xpose.msra.mxu0 0.0
    %1162 = vmatprep.subr.mxu0 0.0
    %1163 = vmatpush1.xpose.msra.mxu0 0.0
    %1164 = vmatprep.subr.mxu0 0.0
    %1165 = vmatpush1.xpose.msra.mxu0 0.0
    %1166 = vmatprep.subr.mxu0 0.0
    %1167 = vmatpush1.xpose.msra.mxu0 0.0
    %1168 = vmatprep.subr.mxu0 0.0
    %1169 = vmatpush1.xpose.msra.mxu0 0.0
    %1170 = vmatprep.subr.mxu0 0.0
    %1171 = vmatpush1.xpose.msra.mxu0 0.0
    %1172 = vmatprep.subr.mxu0 0.0
    %1173 = vmatpush1.xpose.msra.mxu0 0.0
    %1174 = vmatprep.subr.mxu0 0.0
    %1175 = vmatpush1.xpose.msra.mxu0 0.0
    %1176 = vmatprep.subr.mxu0 0.0
    %1177 = vmatpush1.xpose.msra.mxu0 0.0
    %1178 = vmatprep.subr.mxu0 0.0
    %1179 = vmatpush1.xpose.msra.mxu0 0.0
    %1180 = vmatprep.subr.mxu0 0.0
    %1181 = vmatpush1.xpose.msra.mxu0 0.0
    %1182 = vmatprep.subr.mxu0 0.0
    %1183 = vmatpush1.xpose.msra.mxu0 0.0
    %1184 = vmatprep.subr.mxu0 0.0
    %1185 = vmatpush1.xpose.msra.mxu0 0.0
    %1186 = vmatprep.mubr.f32.mxu0 0.0
    %1187 = vmatmul.mubr.f32.gmra.mrb[0].mxu0 %v1117
    %v1188 = vpop.f32.mrb[0].mxu0
    %v1189 = vadd.f32 %v1038, %v1188
    %v1190 = vpop.f32.mrb[0].mxu0
    %1191 = vdwg.mxu0
    %v1193 = vsel %vm1039, %v211, 0
    %v1196 = vsel %vm1039, %v511, 0
    %1198 = vmatprep.subr.mxu0 0.0
    %1199 = vmatpush1.xpose.msra.mxu0 %v1196
    %1200 = vmatprep.subr.mxu0 0.0
    %1201 = vmatpush1.xpose.msra.mxu0 0.0
    %1202 = vmatprep.subr.mxu0 0.0
    %1203 = vmatpush1.xpose.msra.mxu0 0.0
    %1204 = vmatprep.subr.mxu0 0.0
    %1205 = vmatpush1.xpose.msra.mxu0 0.0
    %1206 = vmatprep.subr.mxu0 0.0
    %1207 = vmatpush1.xpose.msra.mxu0 0.0
    %1208 = vmatprep.subr.mxu0 0.0
    %1209 = vmatpush1.xpose.msra.mxu0 0.0
    %1210 = vmatprep.subr.mxu0 0.0
    %1211 = vmatpush1.xpose.msra.mxu0 0.0
    %1212 = vmatprep.subr.mxu0 0.0
    %1213 = vmatpush1.xpose.msra.mxu0 0.0
    %1214 = vmatprep.subr.mxu0 0.0
    %1215 = vmatpush1.xpose.msra.mxu0 0.0
    %1216 = vmatprep.subr.mxu0 0.0
    %1217 = vmatpush1.xpose.msra.mxu0 0.0
    %1218 = vmatprep.subr.mxu0 0.0
    %1219 = vmatpush1.xpose.msra.mxu0 0.0
    %1220 = vmatprep.subr.mxu0 0.0
    %1221 = vmatpush1.xpose.msra.mxu0 0.0
    %1222 = vmatprep.subr.mxu0 0.0
    %1223 = vmatpush1.xpose.msra.mxu0 0.0
    %1224 = vmatprep.subr.mxu0 0.0
    %1225 = vmatpush1.xpose.msra.mxu0 0.0
    %1226 = vmatprep.subr.mxu0 0.0
    %1227 = vmatpush1.xpose.msra.mxu0 0.0
    %1228 = vmatprep.subr.mxu0 0.0
    %1229 = vmatpush1.xpose.msra.mxu0 0.0
    %1230 = vmatprep.subr.mxu0 0.0
    %1231 = vmatpush1.xpose.msra.mxu0 0.0
    %1232 = vmatprep.subr.mxu0 0.0
    %1233 = vmatpush1.xpose.msra.mxu0 0.0
    %1234 = vmatprep.subr.mxu0 0.0
    %1235 = vmatpush1.xpose.msra.mxu0 0.0
    %1236 = vmatprep.subr.mxu0 0.0
    %1237 = vmatpush1.xpose.msra.mxu0 0.0
    %1238 = vmatprep.subr.mxu0 0.0
    %1239 = vmatpush1.xpose.msra.mxu0 0.0
    %1240 = vmatprep.subr.mxu0 0.0
    %1241 = vmatpush1.xpose.msra.mxu0 0.0
    %1242 = vmatprep.subr.mxu0 0.0
    %1243 = vmatpush1.xpose.msra.mxu0 0.0
    %1244 = vmatprep.subr.mxu0 0.0
    %1245 = vmatpush1.xpose.msra.mxu0 0.0
    %1246 = vmatprep.subr.mxu0 0.0
    %1247 = vmatpush1.xpose.msra.mxu0 0.0
    %1248 = vmatprep.subr.mxu0 0.0
    %1249 = vmatpush1.xpose.msra.mxu0 0.0
    %1250 = vmatprep.subr.mxu0 0.0
    %1251 = vmatpush1.xpose.msra.mxu0 0.0
    %1252 = vmatprep.subr.mxu0 0.0
    %1253 = vmatpush1.xpose.msra.mxu0 0.0
    %1254 = vmatprep.subr.mxu0 0.0
    %1255 = vmatpush1.xpose.msra.mxu0 0.0
    %1256 = vmatprep.subr.mxu0 0.0
    %1257 = vmatpush1.xpose.msra.mxu0 0.0
    %1258 = vmatprep.subr.mxu0 0.0
    %1259 = vmatpush1.xpose.msra.mxu0 0.0
    %1260 = vmatprep.subr.mxu0 0.0
    %1261 = vmatpush1.xpose.msra.mxu0 0.0
    %1262 = vmatprep.mubr.f32.mxu0 0.0
    %1263 = vmatmul.mubr.f32.gmra.mrb[0].mxu0 %v1193
    %v1264 = vpop.f32.mrb[0].mxu0
    %v1265 = vadd.f32 %v1038, %v1264
    %v1266 = vpop.f32.mrb[0].mxu0
    %1267 = vdwg.mxu0
    %v1269 = vsel %vm1039, %v216, 0
    %v1272 = vsel %vm1039, %v516, 0
    %1274 = vmatprep.subr.mxu0 0.0
    %1275 = vmatpush1.xpose.msra.mxu0 %v1272
    %1276 = vmatprep.subr.mxu0 0.0
    %1277 = vmatpush1.xpose.msra.mxu0 0.0
    %1278 = vmatprep.subr.mxu0 0.0
    %1279 = vmatpush1.xpose.msra.mxu0 0.0
    %1280 = vmatprep.subr.mxu0 0.0
    %1281 = vmatpush1.xpose.msra.mxu0 0.0
    %1282 = vmatprep.subr.mxu0 0.0
    %1283 = vmatpush1.xpose.msra.mxu0 0.0
    %1284 = vmatprep.subr.mxu0 0.0
    %1285 = vmatpush1.xpose.msra.mxu0 0.0
    %1286 = vmatprep.subr.mxu0 0.0
    %1287 = vmatpush1.xpose.msra.mxu0 0.0
    %1288 = vmatprep.subr.mxu0 0.0
    %1289 = vmatpush1.xpose.msra.mxu0 0.0
    %1290 = vmatprep.subr.mxu0 0.0
    %1291 = vmatpush1.xpose.msra.mxu0 0.0
    %1292 = vmatprep.subr.mxu0 0.0
    %1293 = vmatpush1.xpose.msra.mxu0 0.0
    %1294 = vmatprep.subr.mxu0 0.0
    %1295 = vmatpush1.xpose.msra.mxu0 0.0
    %1296 = vmatprep.subr.mxu0 0.0
    %1297 = vmatpush1.xpose.msra.mxu0 0.0
    %1298 = vmatprep.subr.mxu0 0.0
    %1299 = vmatpush1.xpose.msra.mxu0 0.0
    %1300 = vmatprep.subr.mxu0 0.0
    %1301 = vmatpush1.xpose.msra.mxu0 0.0
    %1302 = vmatprep.subr.mxu0 0.0
    %1303 = vmatpush1.xpose.msra.mxu0 0.0
    %1304 = vmatprep.subr.mxu0 0.0
    %1305 = vmatpush1.xpose.msra.mxu0 0.0
    %1306 = vmatprep.subr.mxu0 0.0
    %1307 = vmatpush1.xpose.msra.mxu0 0.0
    %1308 = vmatprep.subr.mxu0 0.0
    %1309 = vmatpush1.xpose.msra.mxu0 0.0
    %1310 = vmatprep.subr.mxu0 0.0
    %1311 = vmatpush1.xpose.msra.mxu0 0.0
    %1312 = vmatprep.subr.mxu0 0.0
    %1313 = vmatpush1.xpose.msra.mxu0 0.0
    %1314 = vmatprep.subr.mxu0 0.0
    %1315 = vmatpush1.xpose.msra.mxu0 0.0
    %1316 = vmatprep.subr.mxu0 0.0
    %1317 = vmatpush1.xpose.msra.mxu0 0.0
    %1318 = vmatprep.subr.mxu0 0.0
    %1319 = vmatpush1.xpose.msra.mxu0 0.0
    %1320 = vmatprep.subr.mxu0 0.0
    %1321 = vmatpush1.xpose.msra.mxu0 0.0
    %1322 = vmatprep.subr.mxu0 0.0
    %1323 = vmatpush1.xpose.msra.mxu0 0.0
    %1324 = vmatprep.subr.mxu0 0.0
    %1325 = vmatpush1.xpose.msra.mxu0 0.0
    %1326 = vmatprep.subr.mxu0 0.0
    %1327 = vmatpush1.xpose.msra.mxu0 0.0
    %1328 = vmatprep.subr.mxu0 0.0
    %1329 = vmatpush1.xpose.msra.mxu0 0.0
    %1330 = vmatprep.subr.mxu0 0.0
    %1331 = vmatpush1.xpose.msra.mxu0 0.0
    %1332 = vmatprep.subr.mxu0 0.0
    %1333 = vmatpush1.xpose.msra.mxu0 0.0
    %1334 = vmatprep.subr.mxu0 0.0
    %1335 = vmatpush1.xpose.msra.mxu0 0.0
    %1336 = vmatprep.subr.mxu0 0.0
    %1337 = vmatpush1.xpose.msra.mxu0 0.0
    %1338 = vmatprep.mubr.f32.mxu0 0.0
    %1339 = vmatmul.mubr.f32.gmra.mrb[0].mxu0 %v1269
    %v1340 = vpop.f32.mrb[0].mxu0
    %v1341 = vadd.f32 %v1038, %v1340
    %v1342 = vpop.f32.mrb[0].mxu0
    %1343 = vdwg.mxu0
    %v1345 = vsel %vm1039, %v286, 0
    %v1348 = vsel %vm1039, %v586, 0
    %1350 = vmatprep.subr.mxu0 0.0
    %1351 = vmatpush1.xpose.msra.mxu0 %v1348
    %1352 = vmatprep.subr.mxu0 0.0
    %1353 = vmatpush1.xpose.msra.mxu0 0.0
    %1354 = vmatprep.subr.mxu0 0.0
    %1355 = vmatpush1.xpose.msra.mxu0 0.0
    %1356 = vmatprep.subr.mxu0 0.0
    %1357 = vmatpush1.xpose.msra.mxu0 0.0
    %1358 = vmatprep.subr.mxu0 0.0
    %1359 = vmatpush1.xpose.msra.mxu0 0.0
    %1360 = vmatprep.subr.mxu0 0.0
    %1361 = vmatpush1.xpose.msra.mxu0 0.0
    %1362 = vmatprep.subr.mxu0 0.0
    %1363 = vmatpush1.xpose.msra.mxu0 0.0
    %1364 = vmatprep.subr.mxu0 0.0
    %1365 = vmatpush1.xpose.msra.mxu0 0.0
    %1366 = vmatprep.subr.mxu0 0.0
    %1367 = vmatpush1.xpose.msra.mxu0 0.0
    %1368 = vmatprep.subr.mxu0 0.0
    %1369 = vmatpush1.xpose.msra.mxu0 0.0
    %1370 = vmatprep.subr.mxu0 0.0
    %1371 = vmatpush1.xpose.msra.mxu0 0.0
    %1372 = vmatprep.subr.mxu0 0.0
    %1373 = vmatpush1.xpose.msra.mxu0 0.0
    %1374 = vmatprep.subr.mxu0 0.0
    %1375 = vmatpush1.xpose.msra.mxu0 0.0
    %1376 = vmatprep.subr.mxu0 0.0
    %1377 = vmatpush1.xpose.msra.mxu0 0.0
    %1378 = vmatprep.subr.mxu0 0.0
    %1379 = vmatpush1.xpose.msra.mxu0 0.0
    %1380 = vmatprep.subr.mxu0 0.0
    %1381 = vmatpush1.xpose.msra.mxu0 0.0
    %1382 = vmatprep.subr.mxu0 0.0
    %1383 = vmatpush1.xpose.msra.mxu0 0.0
    %1384 = vmatprep.subr.mxu0 0.0
    %1385 = vmatpush1.xpose.msra.mxu0 0.0
    %1386 = vmatprep.subr.mxu0 0.0
    %1387 = vmatpush1.xpose.msra.mxu0 0.0
    %1388 = vmatprep.subr.mxu0 0.0
    %1389 = vmatpush1.xpose.msra.mxu0 0.0
    %1390 = vmatprep.subr.mxu0 0.0
    %1391 = vmatpush1.xpose.msra.mxu0 0.0
    %1392 = vmatprep.subr.mxu0 0.0
    %1393 = vmatpush1.xpose.msra.mxu0 0.0
    %1394 = vmatprep.subr.mxu0 0.0
    %1395 = vmatpush1.xpose.msra.mxu0 0.0
    %1396 = vmatprep.subr.mxu0 0.0
    %1397 = vmatpush1.xpose.msra.mxu0 0.0
    %1398 = vmatprep.subr.mxu0 0.0
    %1399 = vmatpush1.xpose.msra.mxu0 0.0
    %1400 = vmatprep.subr.mxu0 0.0
    %1401 = vmatpush1.xpose.msra.mxu0 0.0
    %1402 = vmatprep.subr.mxu0 0.0
    %1403 = vmatpush1.xpose.msra.mxu0 0.0
    %1404 = vmatprep.subr.mxu0 0.0
    %1405 = vmatpush1.xpose.msra.mxu0 0.0
    %1406 = vmatprep.subr.mxu0 0.0
    %1407 = vmatpush1.xpose.msra.mxu0 0.0
    %1408 = vmatprep.subr.mxu0 0.0
    %1409 = vmatpush1.xpose.msra.mxu0 0.0
    %1410 = vmatprep.subr.mxu0 0.0
    %1411 = vmatpush1.xpose.msra.mxu0 0.0
    %1412 = vmatprep.subr.mxu0 0.0
    %1413 = vmatpush1.xpose.msra.mxu0 0.0
    %1414 = vmatprep.mubr.f32.mxu0 0.0
    %1415 = vmatmul.mubr.f32.gmra.mrb[0].mxu0 %v1345
    %v1416 = vpop.f32.mrb[0].mxu0
    %v1417 = vadd.f32 %v1038, %v1416
    %v1418 = vpop.f32.mrb[0].mxu0
    %1419 = vdwg.mxu0
    %v1421 = vsel %vm1039, %v291, 0
    %v1424 = vsel %vm1039, %v591, 0
    %1426 = vmatprep.subr.mxu0 0.0
    %1427 = vmatpush1.xpose.msra.mxu0 %v1424
    %1428 = vmatprep.subr.mxu0 0.0
    %1429 = vmatpush1.xpose.msra.mxu0 0.0
    %1430 = vmatprep.subr.mxu0 0.0
    %1431 = vmatpush1.xpose.msra.mxu0 0.0
    %1432 = vmatprep.subr.mxu0 0.0
    %1433 = vmatpush1.xpose.msra.mxu0 0.0
    %1434 = vmatprep.subr.mxu0 0.0
    %1435 = vmatpush1.xpose.msra.mxu0 0.0
    %1436 = vmatprep.subr.mxu0 0.0
    %1437 = vmatpush1.xpose.msra.mxu0 0.0
    %1438 = vmatprep.subr.mxu0 0.0
    %1439 = vmatpush1.xpose.msra.mxu0 0.0
    %1440 = vmatprep.subr.mxu0 0.0
    %1441 = vmatpush1.xpose.msra.mxu0 0.0
    %1442 = vmatprep.subr.mxu0 0.0
    %1443 = vmatpush1.xpose.msra.mxu0 0.0
    %1444 = vmatprep.subr.mxu0 0.0
    %1445 = vmatpush1.xpose.msra.mxu0 0.0
    %1446 = vmatprep.subr.mxu0 0.0
    %1447 = vmatpush1.xpose.msra.mxu0 0.0
    %1448 = vmatprep.subr.mxu0 0.0
    %1449 = vmatpush1.xpose.msra.mxu0 0.0
    %1450 = vmatprep.subr.mxu0 0.0
    %1451 = vmatpush1.xpose.msra.mxu0 0.0
    %1452 = vmatprep.subr.mxu0 0.0
    %1453 = vmatpush1.xpose.msra.mxu0 0.0
    %1454 = vmatprep.subr.mxu0 0.0
    %1455 = vmatpush1.xpose.msra.mxu0 0.0
    %1456 = vmatprep.subr.mxu0 0.0
    %1457 = vmatpush1.xpose.msra.mxu0 0.0
    %1458 = vmatprep.subr.mxu0 0.0
    %1459 = vmatpush1.xpose.msra.mxu0 0.0
    %1460 = vmatprep.subr.mxu0 0.0
    %1461 = vmatpush1.xpose.msra.mxu0 0.0
    %1462 = vmatprep.subr.mxu0 0.0
    %1463 = vmatpush1.xpose.msra.mxu0 0.0
    %1464 = vmatprep.subr.mxu0 0.0
    %1465 = vmatpush1.xpose.msra.mxu0 0.0
    %1466 = vmatprep.subr.mxu0 0.0
    %1467 = vmatpush1.xpose.msra.mxu0 0.0
    %1468 = vmatprep.subr.mxu0 0.0
    %1469 = vmatpush1.xpose.msra.mxu0 0.0
    %1470 = vmatprep.subr.mxu0 0.0
    %1471 = vmatpush1.xpose.msra.mxu0 0.0
    %1472 = vmatprep.subr.mxu0 0.0
    %1473 = vmatpush1.xpose.msra.mxu0 0.0
    %1474 = vmatprep.subr.mxu0 0.0
    %1475 = vmatpush1.xpose.msra.mxu0 0.0
    %1476 = vmatprep.subr.mxu0 0.0
    %1477 = vmatpush1.xpose.msra.mxu0 0.0
    %1478 = vmatprep.subr.mxu0 0.0
    %1479 = vmatpush1.xpose.msra.mxu0 0.0
    %1480 = vmatprep.subr.mxu0 0.0
    %1481 = vmatpush1.xpose.msra.mxu0 0.0
    %1482 = vmatprep.subr.mxu0 0.0
    %1483 = vmatpush1.xpose.msra.mxu0 0.0
    %1484 = vmatprep.subr.mxu0 0.0
    %1485 = vmatpush1.xpose.msra.mxu0 0.0
    %1486 = vmatprep.subr.mxu0 0.0
    %1487 = vmatpush1.xpose.msra.mxu0 0.0
    %1488 = vmatprep.subr.mxu0 0.0
    %1489 = vmatpush1.xpose.msra.mxu0 0.0
    %1490 = vmatprep.mubr.f32.mxu0 0.0
    %1491 = vmatmul.mubr.f32.gmra.mrb[0].mxu0 %v1421
    %v1492 = vpop.f32.mrb[0].mxu0
    %v1493 = vadd.f32 %v1038, %v1492
    %v1494 = vpop.f32.mrb[0].mxu0
    %1495 = vdwg.mxu0
    %v1497 = vsel %vm1039, %v361, 0
    %v1500 = vsel %vm1039, %v661, 0
    %1502 = vmatprep.subr.mxu0 0.0
    %1503 = vmatpush1.xpose.msra.mxu0 %v1500
    %1504 = vmatprep.subr.mxu0 0.0
    %1505 = vmatpush1.xpose.msra.mxu0 0.0
    %1506 = vmatprep.subr.mxu0 0.0
    %1507 = vmatpush1.xpose.msra.mxu0 0.0
    %1508 = vmatprep.subr.mxu0 0.0
    %1509 = vmatpush1.xpose.msra.mxu0 0.0
    %1510 = vmatprep.subr.mxu0 0.0
    %1511 = vmatpush1.xpose.msra.mxu0 0.0
    %1512 = vmatprep.subr.mxu0 0.0
    %1513 = vmatpush1.xpose.msra.mxu0 0.0
    %1514 = vmatprep.subr.mxu0 0.0
    %1515 = vmatpush1.xpose.msra.mxu0 0.0
    %1516 = vmatprep.subr.mxu0 0.0
    %1517 = vmatpush1.xpose.msra.mxu0 0.0
    %1518 = vmatprep.subr.mxu0 0.0
    %1519 = vmatpush1.xpose.msra.mxu0 0.0
    %1520 = vmatprep.subr.mxu0 0.0
    %1521 = vmatpush1.xpose.msra.mxu0 0.0
    %1522 = vmatprep.subr.mxu0 0.0
    %1523 = vmatpush1.xpose.msra.mxu0 0.0
    %1524 = vmatprep.subr.mxu0 0.0
    %1525 = vmatpush1.xpose.msra.mxu0 0.0
    %1526 = vmatprep.subr.mxu0 0.0
    %1527 = vmatpush1.xpose.msra.mxu0 0.0
    %1528 = vmatprep.subr.mxu0 0.0
    %1529 = vmatpush1.xpose.msra.mxu0 0.0
    %1530 = vmatprep.subr.mxu0 0.0
    %1531 = vmatpush1.xpose.msra.mxu0 0.0
    %1532 = vmatprep.subr.mxu0 0.0
    %1533 = vmatpush1.xpose.msra.mxu0 0.0
    %1534 = vmatprep.subr.mxu0 0.0
    %1535 = vmatpush1.xpose.msra.mxu0 0.0
    %1536 = vmatprep.subr.mxu0 0.0
    %1537 = vmatpush1.xpose.msra.mxu0 0.0
    %1538 = vmatprep.subr.mxu0 0.0
    %1539 = vmatpush1.xpose.msra.mxu0 0.0
    %1540 = vmatprep.subr.mxu0 0.0
    %1541 = vmatpush1.xpose.msra.mxu0 0.0
    %1542 = vmatprep.subr.mxu0 0.0
    %1543 = vmatpush1.xpose.msra.mxu0 0.0
    %1544 = vmatprep.subr.mxu0 0.0
    %1545 = vmatpush1.xpose.msra.mxu0 0.0
    %1546 = vmatprep.subr.mxu0 0.0
    %1547 = vmatpush1.xpose.msra.mxu0 0.0
    %1548 = vmatprep.subr.mxu0 0.0
    %1549 = vmatpush1.xpose.msra.mxu0 0.0
    %1550 = vmatprep.subr.mxu0 0.0
    %1551 = vmatpush1.xpose.msra.mxu0 0.0
    %1552 = vmatprep.subr.mxu0 0.0
    %1553 = vmatpush1.xpose.msra.mxu0 0.0
    %1554 = vmatprep.subr.mxu0 0.0
    %1555 = vmatpush1.xpose.msra.mxu0 0.0
    %1556 = vmatprep.subr.mxu0 0.0
    %1557 = vmatpush1.xpose.msra.mxu0 0.0
    %1558 = vmatprep.subr.mxu0 0.0
    %1559 = vmatpush1.xpose.msra.mxu0 0.0
    %1560 = vmatprep.subr.mxu0 0.0
    %1561 = vmatpush1.xpose.msra.mxu0 0.0
    %1562 = vmatprep.subr.mxu0 0.0
    %1563 = vmatpush1.xpose.msra.mxu0 0.0
    %1564 = vmatprep.subr.mxu0 0.0
    %1565 = vmatpush1.xpose.msra.mxu0 0.0
    %1566 = vmatprep.mubr.f32.mxu0 0.0
    %1567 = vmatmul.mubr.f32.gmra.mrb[0].mxu0 %v1497
    %v1568 = vpop.f32.mrb[0].mxu0
    %v1569 = vadd.f32 %v1038, %v1568
    %v1570 = vpop.f32.mrb[0].mxu0
    %1571 = vdwg.mxu0
    %v1573 = vsel %vm1039, %v366, 0
    %v1576 = vsel %vm1039, %v666, 0
    %1578 = vmatprep.subr.mxu0 0.0
    %1579 = vmatpush1.xpose.msra.mxu0 %v1576
    %1580 = vmatprep.subr.mxu0 0.0
    %1581 = vmatpush1.xpose.msra.mxu0 0.0
    %1582 = vmatprep.subr.mxu0 0.0
    %1583 = vmatpush1.xpose.msra.mxu0 0.0
    %1584 = vmatprep.subr.mxu0 0.0
    %1585 = vmatpush1.xpose.msra.mxu0 0.0
    %1586 = vmatprep.subr.mxu0 0.0
    %1587 = vmatpush1.xpose.msra.mxu0 0.0
    %1588 = vmatprep.subr.mxu0 0.0
    %1589 = vmatpush1.xpose.msra.mxu0 0.0
    %1590 = vmatprep.subr.mxu0 0.0
    %1591 = vmatpush1.xpose.msra.mxu0 0.0
    %1592 = vmatprep.subr.mxu0 0.0
    %1593 = vmatpush1.xpose.msra.mxu0 0.0
    %1594 = vmatprep.subr.mxu0 0.0
    %1595 = vmatpush1.xpose.msra.mxu0 0.0
    %1596 = vmatprep.subr.mxu0 0.0
    %1597 = vmatpush1.xpose.msra.mxu0 0.0
    %1598 = vmatprep.subr.mxu0 0.0
    %1599 = vmatpush1.xpose.msra.mxu0 0.0
    %1600 = vmatprep.subr.mxu0 0.0
    %1601 = vmatpush1.xpose.msra.mxu0 0.0
    %1602 = vmatprep.subr.mxu0 0.0
    %1603 = vmatpush1.xpose.msra.mxu0 0.0
    %1604 = vmatprep.subr.mxu0 0.0
    %1605 = vmatpush1.xpose.msra.mxu0 0.0
    %1606 = vmatprep.subr.mxu0 0.0
    %1607 = vmatpush1.xpose.msra.mxu0 0.0
    %1608 = vmatprep.subr.mxu0 0.0
    %1609 = vmatpush1.xpose.msra.mxu0 0.0
    %1610 = vmatprep.subr.mxu0 0.0
    %1611 = vmatpush1.xpose.msra.mxu0 0.0
    %1612 = vmatprep.subr.mxu0 0.0
    %1613 = vmatpush1.xpose.msra.mxu0 0.0
    %1614 = vmatprep.subr.mxu0 0.0
    %1615 = vmatpush1.xpose.msra.mxu0 0.0
    %1616 = vmatprep.subr.mxu0 0.0
    %1617 = vmatpush1.xpose.msra.mxu0 0.0
    %1618 = vmatprep.subr.mxu0 0.0
    %1619 = vmatpush1.xpose.msra.mxu0 0.0
    %1620 = vmatprep.subr.mxu0 0.0
    %1621 = vmatpush1.xpose.msra.mxu0 0.0
    %1622 = vmatprep.subr.mxu0 0.0
    %1623 = vmatpush1.xpose.msra.mxu0 0.0
    %1624 = vmatprep.subr.mxu0 0.0
    %1625 = vmatpush1.xpose.msra.mxu0 0.0
    %1626 = vmatprep.subr.mxu0 0.0
    %1627 = vmatpush1.xpose.msra.mxu0 0.0
    %1628 = vmatprep.subr.mxu0 0.0
    %1629 = vmatpush1.xpose.msra.mxu0 0.0
    %1630 = vmatprep.subr.mxu0 0.0
    %1631 = vmatpush1.xpose.msra.mxu0 0.0
    %1632 = vmatprep.subr.mxu0 0.0
    %1633 = vmatpush1.xpose.msra.mxu0 0.0
    %1634 = vmatprep.subr.mxu0 0.0
    %1635 = vmatpush1.xpose.msra.mxu0 0.0
    %1636 = vmatprep.subr.mxu0 0.0
    %1637 = vmatpush1.xpose.msra.mxu0 0.0
    %1638 = vmatprep.subr.mxu0 0.0
    %1639 = vmatpush1.xpose.msra.mxu0 0.0
    %1640 = vmatprep.subr.mxu0 0.0
    %1641 = vmatpush1.xpose.msra.mxu0 0.0
    %1642 = vmatprep.mubr.f32.mxu0 0.0
    %1643 = vmatmul.mubr.f32.gmra.mrb[0].mxu0 %v1573
    %v1644 = vpop.f32.mrb[0].mxu0
    %v1645 = vadd.f32 %v1038, %v1644
    %v1646 = vpop.f32.mrb[0].mxu0
    %1647 = vdwg.mxu0
    %v1648 = vsel %vm1039, %v1113, -inf
    %1649 = vmax.xlane.f32.xlu0 %v1648
    %v1650 = vpop.xlane.xlu0 %1649
    %v1651 = vsel %vm1039, %v1189, -inf
    %1652 = vmax.xlane.f32.xlu0 %v1651
    %v1653 = vpop.xlane.xlu0 %1652
    %v1654 = vsel %vm1039, %v1265, -inf
    %1655 = vmax.xlane.f32.xlu0 %v1654
    %v1656 = vpop.xlane.xlu0 %1655
    %v1657 = vsel %vm1039, %v1341, -inf
    %1658 = vmax.xlane.f32.xlu0 %v1657
    %v1659 = vpop.xlane.xlu0 %1658
    %v1660 = vsel %vm1039, %v1417, -inf
    %1661 = vmax.xlane.f32.xlu0 %v1660
    %v1662 = vpop.xlane.xlu0 %1661
    %v1663 = vsel %vm1039, %v1493, -inf
    %1664 = vmax.xlane.f32.xlu0 %v1663
    %v1665 = vpop.xlane.xlu0 %1664
    %v1666 = vsel %vm1039, %v1569, -inf
    %1667 = vmax.xlane.f32.xlu0 %v1666
    %v1668 = vpop.xlane.xlu0 %1667
    %v1669 = vsel %vm1039, %v1645, -inf
    %1670 = vmax.xlane.f32.xlu0 %v1669
    %v1671 = vpop.xlane.xlu0 %1670
    %v1672 = vsub.f32 %v1113, %v1650
    %v1673 = vsub.f32 %v1189, %v1653
    %v1674 = vsub.f32 %v1265, %v1656
    %v1675 = vsub.f32 %v1341, %v1659
    %v1676 = vsub.f32 %v1417, %v1662
    %v1677 = vsub.f32 %v1493, %v1665
    %v1678 = vsub.f32 %v1569, %v1668
    %v1679 = vsub.f32 %v1645, %v1671
    %v1680 = vmul.f32 %v1672, 1.442695
    %v1681 = vpow.pop %v1680
    %v1682 = vmul.f32 %v1673, 1.442695
    %v1683 = vpow.pop %v1682
    %v1684 = vmul.f32 %v1674, 1.442695
    %v1685 = vpow.pop %v1684
    %v1686 = vmul.f32 %v1675, 1.442695
    %v1687 = vpow.pop %v1686
    %v1688 = vmul.f32 %v1676, 1.442695
    %v1689 = vpow.pop %v1688
    %v1690 = vmul.f32 %v1677, 1.442695
    %v1691 = vpow.pop %v1690
    %v1692 = vmul.f32 %v1678, 1.442695
    %v1693 = vpow.pop %v1692
    %v1694 = vmul.f32 %v1679, 1.442695
    %v1695 = vpow.pop %v1694
    %v1696 = vsel %vm1039, %v1681, 0.0
    %1697 = vadd.xlane.f32.xlu0 %v1696
    %v1698 = vpop.xlane.xlu0 %1697
    %v1699 = vsel %vm1039, %v1683, 0.0
    %1700 = vadd.xlane.f32.xlu0 %v1699
    %v1701 = vpop.xlane.xlu0 %1700
    %v1702 = vsel %vm1039, %v1685, 0.0
    %1703 = vadd.xlane.f32.xlu0 %v1702
    %v1704 = vpop.xlane.xlu0 %1703
    %v1705 = vsel %vm1039, %v1687, 0.0
    %1706 = vadd.xlane.f32.xlu0 %v1705
    %v1707 = vpop.xlane.xlu0 %1706
    %v1708 = vsel %vm1039, %v1689, 0.0
    %1709 = vadd.xlane.f32.xlu0 %v1708
    %v1710 = vpop.xlane.xlu0 %1709
    %v1711 = vsel %vm1039, %v1691, 0.0
    %1712 = vadd.xlane.f32.xlu0 %v1711
    %v1713 = vpop.xlane.xlu0 %1712
    %v1714 = vsel %vm1039, %v1693, 0.0
    %1715 = vadd.xlane.f32.xlu0 %v1714
    %v1716 = vpop.xlane.xlu0 %1715
    %v1717 = vsel %vm1039, %v1695, 0.0
    %1718 = vadd.xlane.f32.xlu0 %v1717
    %v1719 = vpop.xlane.xlu0 %1718
    %v1720 = vrcp.pop %v1698
    %v1721 = vrcp.pop %v1701
    %v1722 = vrcp.pop %v1704
    %v1723 = vrcp.pop %v1707
    %v1724 = vrcp.pop %v1710
    %v1725 = vrcp.pop %v1713
    %v1726 = vrcp.pop %v1716
    %v1727 = vrcp.pop %v1719
    %v1728 = vmul.f32 %v1698, %v1720
    %v1729 = vmul.f32 %v1701, %v1721
    %v1730 = vmul.f32 %v1704, %v1722
    %v1731 = vmul.f32 %v1707, %v1723
    %v1732 = vmul.f32 %v1710, %v1724
    %v1733 = vmul.f32 %v1713, %v1725
    %v1734 = vmul.f32 %v1716, %v1726
    %v1735 = vmul.f32 %v1719, %v1727
    %v1736 = vsub.f32 2.0, %v1728
    %v1737 = vsub.f32 2.0, %v1729
    %v1738 = vsub.f32 2.0, %v1730
    %v1739 = vsub.f32 2.0, %v1731
    %v1740 = vsub.f32 2.0, %v1732
    %v1741 = vsub.f32 2.0, %v1733
    %v1742 = vsub.f32 2.0, %v1734
    %v1743 = vsub.f32 2.0, %v1735
    %v1744 = vmul.f32 %v1720, %v1736
    %v1745 = vmul.f32 %v1721, %v1737
    %v1746 = vmul.f32 %v1722, %v1738
    %v1747 = vmul.f32 %v1723, %v1739
    %v1748 = vmul.f32 %v1724, %v1740
    %v1749 = vmul.f32 %v1725, %v1741
    %v1750 = vmul.f32 %v1726, %v1742
    %v1751 = vmul.f32 %v1727, %v1743
    %v1752 = vmul.f32 %v1681, %v1744
    %v1753 = vmul.f32 %v1683, %v1745
    %v1754 = vmul.f32 %v1685, %v1746
    %v1755 = vmul.f32 %v1687, %v1747
    %v1756 = vmul.f32 %v1689, %v1748
    %v1757 = vmul.f32 %v1691, %v1749
    %v1758 = vmul.f32 %v1693, %v1750
    %v1759 = vmul.f32 %v1695, %v1751
    %v1761 = vsel %vm1039, %v1752, 0
    %1763 = vmatprep.subr.mxu0 0.0
    %1764 = vmatpush1.msra.mxu0 %v800
    %1765 = vmatprep.subr.mxu0 0.0
    %1766 = vmatpush1.msra.mxu0 0.0
    %1767 = vmatprep.subr.mxu0 0.0
    %1768 = vmatpush1.msra.mxu0 0.0
    %1769 = vmatprep.subr.mxu0 0.0
    %1770 = vmatpush1.msra.mxu0 0.0
    %1771 = vmatprep.subr.mxu0 0.0
    %1772 = vmatpush1.msra.mxu0 0.0
    %1773 = vmatprep.subr.mxu0 0.0
    %1774 = vmatpush1.msra.mxu0 0.0
    %1775 = vmatprep.subr.mxu0 0.0
    %1776 = vmatpush1.msra.mxu0 0.0
    %1777 = vmatprep.subr.mxu0 0.0
    %1778 = vmatpush1.msra.mxu0 0.0
    %1779 = vmatprep.subr.mxu0 0.0
    %1780 = vmatpush1.msra.mxu0 0.0
    %1781 = vmatprep.subr.mxu0 0.0
    %1782 = vmatpush1.msra.mxu0 0.0
    %1783 = vmatprep.subr.mxu0 0.0
    %1784 = vmatpush1.msra.mxu0 0.0
    %1785 = vmatprep.subr.mxu0 0.0
    %1786 = vmatpush1.msra.mxu0 0.0
    %1787 = vmatprep.subr.mxu0 0.0
    %1788 = vmatpush1.msra.mxu0 0.0
    %1789 = vmatprep.subr.mxu0 0.0
    %1790 = vmatpush1.msra.mxu0 0.0
    %1791 = vmatprep.subr.mxu0 0.0
    %1792 = vmatpush1.msra.mxu0 0.0
    %1793 = vmatprep.subr.mxu0 0.0
    %1794 = vmatpush1.msra.mxu0 0.0
    %1795 = vmatprep.subr.mxu0 0.0
    %1796 = vmatpush1.msra.mxu0 0.0
    %1797 = vmatprep.subr.mxu0 0.0
    %1798 = vmatpush1.msra.mxu0 0.0
    %1799 = vmatprep.subr.mxu0 0.0
    %1800 = vmatpush1.msra.mxu0 0.0
    %1801 = vmatprep.subr.mxu0 0.0
    %1802 = vmatpush1.msra.mxu0 0.0
    %1803 = vmatprep.subr.mxu0 0.0
    %1804 = vmatpush1.msra.mxu0 0.0
    %1805 = vmatprep.subr.mxu0 0.0
    %1806 = vmatpush1.msra.mxu0 0.0
    %1807 = vmatprep.subr.mxu0 0.0
    %1808 = vmatpush1.msra.mxu0 0.0
    %1809 = vmatprep.subr.mxu0 0.0
    %1810 = vmatpush1.msra.mxu0 0.0
    %1811 = vmatprep.subr.mxu0 0.0
    %1812 = vmatpush1.msra.mxu0 0.0
    %1813 = vmatprep.subr.mxu0 0.0
    %1814 = vmatpush1.msra.mxu0 0.0
    %1815 = vmatprep.subr.mxu0 0.0
    %1816 = vmatpush1.msra.mxu0 0.0
    %1817 = vmatprep.subr.mxu0 0.0
    %1818 = vmatpush1.msra.mxu0 0.0
    %1819 = vmatprep.subr.mxu0 0.0
    %1820 = vmatpush1.msra.mxu0 0.0
    %1821 = vmatprep.subr.mxu0 0.0
    %1822 = vmatpush1.msra.mxu0 0.0
    %1823 = vmatprep.subr.mxu0 0.0
    %1824 = vmatpush1.msra.mxu0 0.0
    %1825 = vmatprep.subr.mxu0 0.0
    %1826 = vmatpush1.msra.mxu0 0.0
    %1827 = vmatprep.mubr.f32.mxu0 0.0
    %1828 = vmatmul.mubr.f32.gmra.mrb[0].mxu0 %v1761
    %v1829 = vpop.f32.mrb[0].mxu0
    %v1830 = vadd.f32 0.0, %v1829
    %v1831 = vpop.f32.mrb[0].mxu0
    %1832 = vdwg.mxu0
    %v1834 = vsel %vm1039, %v1753, 0
    %1836 = vmatprep.subr.mxu0 0.0
    %1837 = vmatpush1.msra.mxu0 %v805
    %1838 = vmatprep.subr.mxu0 0.0
    %1839 = vmatpush1.msra.mxu0 0.0
    %1840 = vmatprep.subr.mxu0 0.0
    %1841 = vmatpush1.msra.mxu0 0.0
    %1842 = vmatprep.subr.mxu0 0.0
    %1843 = vmatpush1.msra.mxu0 0.0
    %1844 = vmatprep.subr.mxu0 0.0
    %1845 = vmatpush1.msra.mxu0 0.0
    %1846 = vmatprep.subr.mxu0 0.0
    %1847 = vmatpush1.msra.mxu0 0.0
    %1848 = vmatprep.subr.mxu0 0.0
    %1849 = vmatpush1.msra.mxu0 0.0
    %1850 = vmatprep.subr.mxu0 0.0
    %1851 = vmatpush1.msra.mxu0 0.0
    %1852 = vmatprep.subr.mxu0 0.0
    %1853 = vmatpush1.msra.mxu0 0.0
    %1854 = vmatprep.subr.mxu0 0.0
    %1855 = vmatpush1.msra.mxu0 0.0
    %1856 = vmatprep.subr.mxu0 0.0
    %1857 = vmatpush1.msra.mxu0 0.0
    %1858 = vmatprep.subr.mxu0 0.0
    %1859 = vmatpush1.msra.mxu0 0.0
    %1860 = vmatprep.subr.mxu0 0.0
    %1861 = vmatpush1.msra.mxu0 0.0
    %1862 = vmatprep.subr.mxu0 0.0
    %1863 = vmatpush1.msra.mxu0 0.0
    %1864 = vmatprep.subr.mxu0 0.0
    %1865 = vmatpush1.msra.mxu0 0.0
    %1866 = vmatprep.subr.mxu0 0.0
    %1867 = vmatpush1.msra.mxu0 0.0
    %1868 = vmatprep.subr.mxu0 0.0
    %1869 = vmatpush1.msra.mxu0 0.0
    %1870 = vmatprep.subr.mxu0 0.0
    %1871 = vmatpush1.msra.mxu0 0.0
    %1872 = vmatprep.subr.mxu0 0.0
    %1873 = vmatpush1.msra.mxu0 0.0
    %1874 = vmatprep.subr.mxu0 0.0
    %1875 = vmatpush1.msra.mxu0 0.0
    %1876 = vmatprep.subr.mxu0 0.0
    %1877 = vmatpush1.msra.mxu0 0.0
    %1878 = vmatprep.subr.mxu0 0.0
    %1879 = vmatpush1.msra.mxu0 0.0
    %1880 = vmatprep.subr.mxu0 0.0
    %1881 = vmatpush1.msra.mxu0 0.0
    %1882 = vmatprep.subr.mxu0 0.0
    %1883 = vmatpush1.msra.mxu0 0.0
    %1884 = vmatprep.subr.mxu0 0.0
    %1885 = vmatpush1.msra.mxu0 0.0
    %1886 = vmatprep.subr.mxu0 0.0
    %1887 = vmatpush1.msra.mxu0 0.0
    %1888 = vmatprep.subr.mxu0 0.0
    %1889 = vmatpush1.msra.mxu0 0.0
    %1890 = vmatprep.subr.mxu0 0.0
    %1891 = vmatpush1.msra.mxu0 0.0
    %1892 = vmatprep.subr.mxu0 0.0
    %1893 = vmatpush1.msra.mxu0 0.0
    %1894 = vmatprep.subr.mxu0 0.0
    %1895 = vmatpush1.msra.mxu0 0.0
    %1896 = vmatprep.subr.mxu0 0.0
    %1897 = vmatpush1.msra.mxu0 0.0
    %1898 = vmatprep.subr.mxu0 0.0
    %1899 = vmatpush1.msra.mxu0 0.0
    %1900 = vmatprep.mubr.f32.mxu0 0.0
    %1901 = vmatmul.mubr.f32.gmra.mrb[0].mxu0 %v1834
    %v1902 = vpop.f32.mrb[0].mxu0
    %v1903 = vadd.f32 0.0, %v1902
    %v1904 = vpop.f32.mrb[0].mxu0
    %1905 = vdwg.mxu0
    %v1907 = vsel %vm1039, %v1754, 0
    %1909 = vmatprep.subr.mxu0 0.0
    %1910 = vmatpush1.msra.mxu0 %v875
    %1911 = vmatprep.subr.mxu0 0.0
    %1912 = vmatpush1.msra.mxu0 0.0
    %1913 = vmatprep.subr.mxu0 0.0
    %1914 = vmatpush1.msra.mxu0 0.0
    %1915 = vmatprep.subr.mxu0 0.0
    %1916 = vmatpush1.msra.mxu0 0.0
    %1917 = vmatprep.subr.mxu0 0.0
    %1918 = vmatpush1.msra.mxu0 0.0
    %1919 = vmatprep.subr.mxu0 0.0
    %1920 = vmatpush1.msra.mxu0 0.0
    %1921 = vmatprep.subr.mxu0 0.0
    %1922 = vmatpush1.msra.mxu0 0.0
    %1923 = vmatprep.subr.mxu0 0.0
    %1924 = vmatpush1.msra.mxu0 0.0
    %1925 = vmatprep.subr.mxu0 0.0
    %1926 = vmatpush1.msra.mxu0 0.0
    %1927 = vmatprep.subr.mxu0 0.0
    %1928 = vmatpush1.msra.mxu0 0.0
    %1929 = vmatprep.subr.mxu0 0.0
    %1930 = vmatpush1.msra.mxu0 0.0
    %1931 = vmatprep.subr.mxu0 0.0
    %1932 = vmatpush1.msra.mxu0 0.0
    %1933 = vmatprep.subr.mxu0 0.0
    %1934 = vmatpush1.msra.mxu0 0.0
    %1935 = vmatprep.subr.mxu0 0.0
    %1936 = vmatpush1.msra.mxu0 0.0
    %1937 = vmatprep.subr.mxu0 0.0
    %1938 = vmatpush1.msra.mxu0 0.0
    %1939 = vmatprep.subr.mxu0 0.0
    %1940 = vmatpush1.msra.mxu0 0.0
    %1941 = vmatprep.subr.mxu0 0.0
    %1942 = vmatpush1.msra.mxu0 0.0
    %1943 = vmatprep.subr.mxu0 0.0
    %1944 = vmatpush1.msra.mxu0 0.0
    %1945 = vmatprep.subr.mxu0 0.0
    %1946 = vmatpush1.msra.mxu0 0.0
    %1947 = vmatprep.subr.mxu0 0.0
    %1948 = vmatpush1.msra.mxu0 0.0
    %1949 = vmatprep.subr.mxu0 0.0
    %1950 = vmatpush1.msra.mxu0 0.0
    %1951 = vmatprep.subr.mxu0 0.0
    %1952 = vmatpush1.msra.mxu0 0.0
    %1953 = vmatprep.subr.mxu0 0.0
    %1954 = vmatpush1.msra.mxu0 0.0
    %1955 = vmatprep.subr.mxu0 0.0
    %1956 = vmatpush1.msra.mxu0 0.0
    %1957 = vmatprep.subr.mxu0 0.0
    %1958 = vmatpush1.msra.mxu0 0.0
    %1959 = vmatprep.subr.mxu0 0.0
    %1960 = vmatpush1.msra.mxu0 0.0
    %1961 = vmatprep.subr.mxu0 0.0
    %1962 = vmatpush1.msra.mxu0 0.0
    %1963 = vmatprep.subr.mxu0 0.0
    %1964 = vmatpush1.msra.mxu0 0.0
    %1965 = vmatprep.subr.mxu0 0.0
    %1966 = vmatpush1.msra.mxu0 0.0
    %1967 = vmatprep.subr.mxu0 0.0
    %1968 = vmatpush1.msra.mxu0 0.0
    %1969 = vmatprep.subr.mxu0 0.0
    %1970 = vmatpush1.msra.mxu0 0.0
    %1971 = vmatprep.subr.mxu0 0.0
    %1972 = vmatpush1.msra.mxu0 0.0
    %1973 = vmatprep.mubr.f32.mxu0 0.0
    %1974 = vmatmul.mubr.f32.gmra.mrb[0].mxu0 %v1907
    %v1975 = vpop.f32.mrb[0].mxu0
    %v1976 = vadd.f32 0.0, %v1975
    %v1977 = vpop.f32.mrb[0].mxu0
    %1978 = vdwg.mxu0
    %v1980 = vsel %vm1039, %v1755, 0
    %1982 = vmatprep.subr.mxu0 0.0
    %1983 = vmatpush1.msra.mxu0 %v880
    %1984 = vmatprep.subr.mxu0 0.0
    %1985 = vmatpush1.msra.mxu0 0.0
    %1986 = vmatprep.subr.mxu0 0.0
    %1987 = vmatpush1.msra.mxu0 0.0
    %1988 = vmatprep.subr.mxu0 0.0
    %1989 = vmatpush1.msra.mxu0 0.0
    %1990 = vmatprep.subr.mxu0 0.0
    %1991 = vmatpush1.msra.mxu0 0.0
    %1992 = vmatprep.subr.mxu0 0.0
    %1993 = vmatpush1.msra.mxu0 0.0
    %1994 = vmatprep.subr.mxu0 0.0
    %1995 = vmatpush1.msra.mxu0 0.0
    %1996 = vmatprep.subr.mxu0 0.0
    %1997 = vmatpush1.msra.mxu0 0.0
    %1998 = vmatprep.subr.mxu0 0.0
    %1999 = vmatpush1.msra.mxu0 0.0
    %2000 = vmatprep.subr.mxu0 0.0
    %2001 = vmatpush1.msra.mxu0 0.0
    %2002 = vmatprep.subr.mxu0 0.0
    %2003 = vmatpush1.msra.mxu0 0.0
    %2004 = vmatprep.subr.mxu0 0.0
    %2005 = vmatpush1.msra.mxu0 0.0
    %2006 = vmatprep.subr.mxu0 0.0
    %2007 = vmatpush1.msra.mxu0 0.0
    %2008 = vmatprep.subr.mxu0 0.0
    %2009 = vmatpush1.msra.mxu0 0.0
    %2010 = vmatprep.subr.mxu0 0.0
    %2011 = vmatpush1.msra.mxu0 0.0
    %2012 = vmatprep.subr.mxu0 0.0
    %2013 = vmatpush1.msra.mxu0 0.0
    %2014 = vmatprep.subr.mxu0 0.0
    %2015 = vmatpush1.msra.mxu0 0.0
    %2016 = vmatprep.subr.mxu0 0.0
    %2017 = vmatpush1.msra.mxu0 0.0
    %2018 = vmatprep.subr.mxu0 0.0
    %2019 = vmatpush1.msra.mxu0 0.0
    %2020 = vmatprep.subr.mxu0 0.0
    %2021 = vmatpush1.msra.mxu0 0.0
    %2022 = vmatprep.subr.mxu0 0.0
    %2023 = vmatpush1.msra.mxu0 0.0
    %2024 = vmatprep.subr.mxu0 0.0
    %2025 = vmatpush1.msra.mxu0 0.0
    %2026 = vmatprep.subr.mxu0 0.0
    %2027 = vmatpush1.msra.mxu0 0.0
    %2028 = vmatprep.subr.mxu0 0.0
    %2029 = vmatpush1.msra.mxu0 0.0
    %2030 = vmatprep.subr.mxu0 0.0
    %2031 = vmatpush1.msra.mxu0 0.0
    %2032 = vmatprep.subr.mxu0 0.0
    %2033 = vmatpush1.msra.mxu0 0.0
    %2034 = vmatprep.subr.mxu0 0.0
    %2035 = vmatpush1.msra.mxu0 0.0
    %2036 = vmatprep.subr.mxu0 0.0
    %2037 = vmatpush1.msra.mxu0 0.0
    %2038 = vmatprep.subr.mxu0 0.0
    %2039 = vmatpush1.msra.mxu0 0.0
    %2040 = vmatprep.subr.mxu0 0.0
    %2041 = vmatpush1.msra.mxu0 0.0
    %2042 = vmatprep.subr.mxu0 0.0
    %2043 = vmatpush1.msra.mxu0 0.0
    %2044 = vmatprep.subr.mxu0 0.0
    %2045 = vmatpush1.msra.mxu0 0.0
    %2046 = vmatprep.mubr.f32.mxu0 0.0
    %2047 = vmatmul.mubr.f32.gmra.mrb[0].mxu0 %v1980
    %v2048 = vpop.f32.mrb[0].mxu0
    %v2049 = vadd.f32 0.0, %v2048
    %v2050 = vpop.f32.mrb[0].mxu0
    %2051 = vdwg.mxu0
    %v2053 = vsel %vm1039, %v1756, 0
    %2055 = vmatprep.subr.mxu0 0.0
    %2056 = vmatpush1.msra.mxu0 %v950
    %2057 = vmatprep.subr.mxu0 0.0
    %2058 = vmatpush1.msra.mxu0 0.0
    %2059 = vmatprep.subr.mxu0 0.0
    %2060 = vmatpush1.msra.mxu0 0.0
    %2061 = vmatprep.subr.mxu0 0.0
    %2062 = vmatpush1.msra.mxu0 0.0
    %2063 = vmatprep.subr.mxu0 0.0
    %2064 = vmatpush1.msra.mxu0 0.0
    %2065 = vmatprep.subr.mxu0 0.0
    %2066 = vmatpush1.msra.mxu0 0.0
    %2067 = vmatprep.subr.mxu0 0.0
    %2068 = vmatpush1.msra.mxu0 0.0
    %2069 = vmatprep.subr.mxu0 0.0
    %2070 = vmatpush1.msra.mxu0 0.0
    %2071 = vmatprep.subr.mxu0 0.0
    %2072 = vmatpush1.msra.mxu0 0.0
    %2073 = vmatprep.subr.mxu0 0.0
    %2074 = vmatpush1.msra.mxu0 0.0
    %2075 = vmatprep.subr.mxu0 0.0
    %2076 = vmatpush1.msra.mxu0 0.0
    %2077 = vmatprep.subr.mxu0 0.0
    %2078 = vmatpush1.msra.mxu0 0.0
    %2079 = vmatprep.subr.mxu0 0.0
    %2080 = vmatpush1.msra.mxu0 0.0
    %2081 = vmatprep.subr.mxu0 0.0
    %2082 = vmatpush1.msra.mxu0 0.0
    %2083 = vmatprep.subr.mxu0 0.0
    %2084 = vmatpush1.msra.mxu0 0.0
    %2085 = vmatprep.subr.mxu0 0.0
    %2086 = vmatpush1.msra.mxu0 0.0
    %2087 = vmatprep.subr.mxu0 0.0
    %2088 = vmatpush1.msra.mxu0 0.0
    %2089 = vmatprep.subr.mxu0 0.0
    %2090 = vmatpush1.msra.mxu0 0.0
    %2091 = vmatprep.subr.mxu0 0.0
    %2092 = vmatpush1.msra.mxu0 0.0
    %2093 = vmatprep.subr.mxu0 0.0
    %2094 = vmatpush1.msra.mxu0 0.0
    %2095 = vmatprep.subr.mxu0 0.0
    %2096 = vmatpush1.msra.mxu0 0.0
    %2097 = vmatprep.subr.mxu0 0.0
    %2098 = vmatpush1.msra.mxu0 0.0
    %2099 = vmatprep.subr.mxu0 0.0
    %2100 = vmatpush1.msra.mxu0 0.0
    %2101 = vmatprep.subr.mxu0 0.0
    %2102 = vmatpush1.msra.mxu0 0.0
    %2103 = vmatprep.subr.mxu0 0.0
    %2104 = vmatpush1.msra.mxu0 0.0
    %2105 = vmatprep.subr.mxu0 0.0
    %2106 = vmatpush1.msra.mxu0 0.0
    %2107 = vmatprep.subr.mxu0 0.0
    %2108 = vmatpush1.msra.mxu0 0.0
    %2109 = vmatprep.subr.mxu0 0.0
    %2110 = vmatpush1.msra.mxu0 0.0
    %2111 = vmatprep.subr.mxu0 0.0
    %2112 = vmatpush1.msra.mxu0 0.0
    %2113 = vmatprep.subr.mxu0 0.0
    %2114 = vmatpush1.msra.mxu0 0.0
    %2115 = vmatprep.subr.mxu0 0.0
    %2116 = vmatpush1.msra.mxu0 0.0
    %2117 = vmatprep.subr.mxu0 0.0
    %2118 = vmatpush1.msra.mxu0 0.0
    %2119 = vmatprep.mubr.f32.mxu0 0.0
    %2120 = vmatmul.mubr.f32.gmra.mrb[0].mxu0 %v2053
    %v2121 = vpop.f32.mrb[0].mxu0
    %v2122 = vadd.f32 0.0, %v2121
    %v2123 = vpop.f32.mrb[0].mxu0
    %2124 = vdwg.mxu0
    %v2126 = vsel %vm1039, %v1757, 0
    %2128 = vmatprep.subr.mxu0 0.0
    %2129 = vmatpush1.msra.mxu0 %v955
    %2130 = vmatprep.subr.mxu0 0.0
    %2131 = vmatpush1.msra.mxu0 0.0
    %2132 = vmatprep.subr.mxu0 0.0
    %2133 = vmatpush1.msra.mxu0 0.0
    %2134 = vmatprep.subr.mxu0 0.0
    %2135 = vmatpush1.msra.mxu0 0.0
    %2136 = vmatprep.subr.mxu0 0.0
    %2137 = vmatpush1.msra.mxu0 0.0
    %2138 = vmatprep.subr.mxu0 0.0
    %2139 = vmatpush1.msra.mxu0 0.0
    %2140 = vmatprep.subr.mxu0 0.0
    %2141 = vmatpush1.msra.mxu0 0.0
    %2142 = vmatprep.subr.mxu0 0.0
    %2143 = vmatpush1.msra.mxu0 0.0
    %2144 = vmatprep.subr.mxu0 0.0
    %2145 = vmatpush1.msra.mxu0 0.0
    %2146 = vmatprep.subr.mxu0 0.0
    %2147 = vmatpush1.msra.mxu0 0.0
    %2148 = vmatprep.subr.mxu0 0.0
    %2149 = vmatpush1.msra.mxu0 0.0
    %2150 = vmatprep.subr.mxu0 0.0
    %2151 = vmatpush1.msra.mxu0 0.0
    %2152 = vmatprep.subr.mxu0 0.0
    %2153 = vmatpush1.msra.mxu0 0.0
    %2154 = vmatprep.subr.mxu0 0.0
    %2155 = vmatpush1.msra.mxu0 0.0
    %2156 = vmatprep.subr.mxu0 0.0
    %2157 = vmatpush1.msra.mxu0 0.0
    %2158 = vmatprep.subr.mxu0 0.0
    %2159 = vmatpush1.msra.mxu0 0.0
    %2160 = vmatprep.subr.mxu0 0.0
    %2161 = vmatpush1.msra.mxu0 0.0
    %2162 = vmatprep.subr.mxu0 0.0
    %2163 = vmatpush1.msra.mxu0 0.0
    %2164 = vmatprep.subr.mxu0 0.0
    %2165 = vmatpush1.msra.mxu0 0.0
    %2166 = vmatprep.subr.mxu0 0.0
    %2167 = vmatpush1.msra.mxu0 0.0
    %2168 = vmatprep.subr.mxu0 0.0
    %2169 = vmatpush1.msra.mxu0 0.0
    %2170 = vmatprep.subr.mxu0 0.0
    %2171 = vmatpush1.msra.mxu0 0.0
    %2172 = vmatprep.subr.mxu0 0.0
    %2173 = vmatpush1.msra.mxu0 0.0
    %2174 = vmatprep.subr.mxu0 0.0
    %2175 = vmatpush1.msra.mxu0 0.0
    %2176 = vmatprep.subr.mxu0 0.0
    %2177 = vmatpush1.msra.mxu0 0.0
    %2178 = vmatprep.subr.mxu0 0.0
    %2179 = vmatpush1.msra.mxu0 0.0
    %2180 = vmatprep.subr.mxu0 0.0
    %2181 = vmatpush1.msra.mxu0 0.0
    %2182 = vmatprep.subr.mxu0 0.0
    %2183 = vmatpush1.msra.mxu0 0.0
    %2184 = vmatprep.subr.mxu0 0.0
    %2185 = vmatpush1.msra.mxu0 0.0
    %2186 = vmatprep.subr.mxu0 0.0
    %2187 = vmatpush1.msra.mxu0 0.0
    %2188 = vmatprep.subr.mxu0 0.0
    %2189 = vmatpush1.msra.mxu0 0.0
    %2190 = vmatprep.subr.mxu0 0.0
    %2191 = vmatpush1.msra.mxu0 0.0
    %2192 = vmatprep.mubr.f32.mxu0 0.0
    %2193 = vmatmul.mubr.f32.gmra.mrb[0].mxu0 %v2126
    %v2194 = vpop.f32.mrb[0].mxu0
    %v2195 = vadd.f32 0.0, %v2194
    %v2196 = vpop.f32.mrb[0].mxu0
    %2197 = vdwg.mxu0
    %v2199 = vsel %vm1039, %v1758, 0
    %2201 = vmatprep.subr.mxu0 0.0
    %2202 = vmatpush1.msra.mxu0 %v1025
    %2203 = vmatprep.subr.mxu0 0.0
    %2204 = vmatpush1.msra.mxu0 0.0
    %2205 = vmatprep.subr.mxu0 0.0
    %2206 = vmatpush1.msra.mxu0 0.0
    %2207 = vmatprep.subr.mxu0 0.0
    %2208 = vmatpush1.msra.mxu0 0.0
    %2209 = vmatprep.subr.mxu0 0.0
    %2210 = vmatpush1.msra.mxu0 0.0
    %2211 = vmatprep.subr.mxu0 0.0
    %2212 = vmatpush1.msra.mxu0 0.0
    %2213 = vmatprep.subr.mxu0 0.0
    %2214 = vmatpush1.msra.mxu0 0.0
    %2215 = vmatprep.subr.mxu0 0.0
    %2216 = vmatpush1.msra.mxu0 0.0
    %2217 = vmatprep.subr.mxu0 0.0
    %2218 = vmatpush1.msra.mxu0 0.0
    %2219 = vmatprep.subr.mxu0 0.0
    %2220 = vmatpush1.msra.mxu0 0.0
    %2221 = vmatprep.subr.mxu0 0.0
    %2222 = vmatpush1.msra.mxu0 0.0
    %2223 = vmatprep.subr.mxu0 0.0
    %2224 = vmatpush1.msra.mxu0 0.0
    %2225 = vmatprep.subr.mxu0 0.0
    %2226 = vmatpush1.msra.mxu0 0.0
    %2227 = vmatprep.subr.mxu0 0.0
    %2228 = vmatpush1.msra.mxu0 0.0
    %2229 = vmatprep.subr.mxu0 0.0
    %2230 = vmatpush1.msra.mxu0 0.0
    %2231 = vmatprep.subr.mxu0 0.0
    %2232 = vmatpush1.msra.mxu0 0.0
    %2233 = vmatprep.subr.mxu0 0.0
    %2234 = vmatpush1.msra.mxu0 0.0
    %2235 = vmatprep.subr.mxu0 0.0
    %2236 = vmatpush1.msra.mxu0 0.0
    %2237 = vmatprep.subr.mxu0 0.0
    %2238 = vmatpush1.msra.mxu0 0.0
    %2239 = vmatprep.subr.mxu0 0.0
    %2240 = vmatpush1.msra.mxu0 0.0
    %2241 = vmatprep.subr.mxu0 0.0
    %2242 = vmatpush1.msra.mxu0 0.0
    %2243 = vmatprep.subr.mxu0 0.0
    %2244 = vmatpush1.msra.mxu0 0.0
    %2245 = vmatprep.subr.mxu0 0.0
    %2246 = vmatpush1.msra.mxu0 0.0
    %2247 = vmatprep.subr.mxu0 0.0
    %2248 = vmatpush1.msra.mxu0 0.0
    %2249 = vmatprep.subr.mxu0 0.0
    %2250 = vmatpush1.msra.mxu0 0.0
    %2251 = vmatprep.subr.mxu0 0.0
    %2252 = vmatpush1.msra.mxu0 0.0
    %2253 = vmatprep.subr.mxu0 0.0
    %2254 = vmatpush1.msra.mxu0 0.0
    %2255 = vmatprep.subr.mxu0 0.0
    %2256 = vmatpush1.msra.mxu0 0.0
    %2257 = vmatprep.subr.mxu0 0.0
    %2258 = vmatpush1.msra.mxu0 0.0
    %2259 = vmatprep.subr.mxu0 0.0
    %2260 = vmatpush1.msra.mxu0 0.0
    %2261 = vmatprep.subr.mxu0 0.0
    %2262 = vmatpush1.msra.mxu0 0.0
    %2263 = vmatprep.subr.mxu0 0.0
    %2264 = vmatpush1.msra.mxu0 0.0
    %2265 = vmatprep.mubr.f32.mxu0 0.0
    %2266 = vmatmul.mubr.f32.gmra.mrb[0].mxu0 %v2199
    %v2267 = vpop.f32.mrb[0].mxu0
    %v2268 = vadd.f32 0.0, %v2267
    %v2269 = vpop.f32.mrb[0].mxu0
    %2270 = vdwg.mxu0
    %v2272 = vsel %vm1039, %v1759, 0
    %2274 = vmatprep.subr.mxu0 0.0
    %2275 = vmatpush1.msra.mxu0 %v1030
    %2276 = vmatprep.subr.mxu0 0.0
    %2277 = vmatpush1.msra.mxu0 0.0
    %2278 = vmatprep.subr.mxu0 0.0
    %2279 = vmatpush1.msra.mxu0 0.0
    %2280 = vmatprep.subr.mxu0 0.0
    %2281 = vmatpush1.msra.mxu0 0.0
    %2282 = vmatprep.subr.mxu0 0.0
    %2283 = vmatpush1.msra.mxu0 0.0
    %2284 = vmatprep.subr.mxu0 0.0
    %2285 = vmatpush1.msra.mxu0 0.0
    %2286 = vmatprep.subr.mxu0 0.0
    %2287 = vmatpush1.msra.mxu0 0.0
    %2288 = vmatprep.subr.mxu0 0.0
    %2289 = vmatpush1.msra.mxu0 0.0
    %2290 = vmatprep.subr.mxu0 0.0
    %2291 = vmatpush1.msra.mxu0 0.0
    %2292 = vmatprep.subr.mxu0 0.0
    %2293 = vmatpush1.msra.mxu0 0.0
    %2294 = vmatprep.subr.mxu0 0.0
    %2295 = vmatpush1.msra.mxu0 0.0
    %2296 = vmatprep.subr.mxu0 0.0
    %2297 = vmatpush1.msra.mxu0 0.0
    %2298 = vmatprep.subr.mxu0 0.0
    %2299 = vmatpush1.msra.mxu0 0.0
    %2300 = vmatprep.subr.mxu0 0.0
    %2301 = vmatpush1.msra.mxu0 0.0
    %2302 = vmatprep.subr.mxu0 0.0
    %2303 = vmatpush1.msra.mxu0 0.0
    %2304 = vmatprep.subr.mxu0 0.0
    %2305 = vmatpush1.msra.mxu0 0.0
    %2306 = vmatprep.subr.mxu0 0.0
    %2307 = vmatpush1.msra.mxu0 0.0
    %2308 = vmatprep.subr.mxu0 0.0
    %2309 = vmatpush1.msra.mxu0 0.0
    %2310 = vmatprep.subr.mxu0 0.0
    %2311 = vmatpush1.msra.mxu0 0.0
    %2312 = vmatprep.subr.mxu0 0.0
    %2313 = vmatpush1.msra.mxu0 0.0
    %2314 = vmatprep.subr.mxu0 0.0
    %2315 = vmatpush1.msra.mxu0 0.0
    %2316 = vmatprep.subr.mxu0 0.0
    %2317 = vmatpush1.msra.mxu0 0.0
    %2318 = vmatprep.subr.mxu0 0.0
    %2319 = vmatpush1.msra.mxu0 0.0
    %2320 = vmatprep.subr.mxu0 0.0
    %2321 = vmatpush1.msra.mxu0 0.0
    %2322 = vmatprep.subr.mxu0 0.0
    %2323 = vmatpush1.msra.mxu0 0.0
    %2324 = vmatprep.subr.mxu0 0.0
    %2325 = vmatpush1.msra.mxu0 0.0
    %2326 = vmatprep.subr.mxu0 0.0
    %2327 = vmatpush1.msra.mxu0 0.0
    %2328 = vmatprep.subr.mxu0 0.0
    %2329 = vmatpush1.msra.mxu0 0.0
    %2330 = vmatprep.subr.mxu0 0.0
    %2331 = vmatpush1.msra.mxu0 0.0
    %2332 = vmatprep.subr.mxu0 0.0
    %2333 = vmatpush1.msra.mxu0 0.0
    %2334 = vmatprep.subr.mxu0 0.0
    %2335 = vmatpush1.msra.mxu0 0.0
    %2336 = vmatprep.subr.mxu0 0.0
    %2337 = vmatpush1.msra.mxu0 0.0
    %2338 = vmatprep.mubr.f32.mxu0 0.0
    %2339 = vmatmul.mubr.f32.gmra.mrb[0].mxu0 %v2272
    %v2340 = vpop.f32.mrb[0].mxu0
    %v2341 = vadd.f32 0.0, %v2340
    %v2342 = vpop.f32.mrb[0].mxu0
    %2343 = vdwg.mxu0
    %v2344 = vadd.f32 %v1830, %v1976
    %v2345 = vadd.f32 %v1903, %v2049
    %v2346 = vadd.f32 %v2344, %v2122
    %v2347 = vadd.f32 %v2345, %v2195
    %v2348 = vadd.f32 %v2346, %v2268
    %v2349 = vadd.f32 %v2347, %v2341
    %v2350 = vld [vmem:[%s3] sm:$0x1]
    %v2352 = vlaneseq
    %v2353 = vshrl.u32 %v2352, 7
    %v2354 = vsub.s32 0, %v2353
    %v2355 = vrot.slane %v2350, %v2354
    %v2357 = vadd.f32 %v2348, %v2355
    %v2358 = vadd.f32 %v2349, %v2355
    %2359 = vst [vmem:[#allocation8] sm:$0xff] %v2357
    %2360 = vst [vmem:[#allocation8 + $0x8] sm:$0xff] %v2358
    // Predicated region
    $region30: #{tpu_custom_call.1} parent=1 // pred_check
      _
    $region31: #{tpu_custom_call.1} parent=1 // pred_check_branch
      %2362 = sbr.rel (0) target = $region33
    $region32: #{tpu_custom_call.1} parent=1 // pred_region
      %s2364 = ssub.s32 256, 256
      %2365 = vsyncadd [#allocation4], %s2364
      %s2366 = sshll.u32 [#allocation8], 4
      %s2367 = int_to_ptr.vmem [resolvable:$true] %s2366
      %2372 = dma.vmem_to_hbm [thread:$0]  %s2367, 256, %s4, [#allocation4], 128, 128, 8
    $region33: #{tpu_custom_call.1} parent=1 // pred_fallthru
      _
    // Predicated region
    $region34: #{tpu_custom_call.1} parent=1 // pred_check
      _
    $region35: #{tpu_custom_call.1} parent=1 // pred_check_branch
      %2374 = sbr.rel (0) target = $region37
    $region36: #{tpu_custom_call.1} parent=1 // pred_region
      %2375 = dma.done [#allocation4], 256
    $region37: #{tpu_custom_call.1} parent=1 // pred_fallthru
      _
    %2376 = vsyncpa [#allocation3], 1
    %2377 = vsyncpa [#allocation6], 1
    %2378 = vsyncpa [#allocation4], 1

</llo_original>
